<compile_context>
chip_gen: v6e
topology: v6e:2x2x1
jax: 0.10.0
libtpu: 0.0.40
codegen_flags: <defaults>
</compile_context>

<pallas_src>
import math

import jax
import jax.numpy as jnp
from jax.experimental import pallas as pl
from jax.experimental.pallas import tpu as pltpu


_LANE = 128      # lane width: feature dims are zero-padded to multiples of this
_MAX_TB = 512    # batch-tile rows for large batches (~3 MiB per-tile footprint)
_SMALL_B = 32    # at or below this, one full-dims tile (no pad, 1 grid step)


def _round_up(x: int, m: int) -> int:
    return ((x + m - 1) // m) * m


# ----------------------------------------------------------------------------
# Pallas kernel: fused 3-layer MLP head  (Linear-ReLU-Linear-ReLU-Linear)
#   x:  (TB, 512)     f32  (cast to bf16 inside the kernel)
#   wN: (K, N)        bf16 (transposed vs. PyTorch -> lane-dense x @ W)
#   bN: (1, N)        f32
#   o:  (TB, C_pad)   bf16
# ----------------------------------------------------------------------------
def _proj_mlp_kernel(x_ref, w1_ref, b1_ref, w2_ref, b2_ref, w3_ref, b3_ref,
                     o_ref):
    # f32 tile streamed from HBM; bf16 downcast on the VPU hides under MXU/DMA.
    x = x_ref[...].astype(jnp.bfloat16)
    # bias-add + ReLU + downcast fused so only the bf16 intermediate lives on.
    h1 = jnp.maximum(
        jnp.dot(x, w1_ref[...], preferred_element_type=jnp.float32)
        + b1_ref[...], 0.0).astype(jnp.bfloat16)
    h2 = jnp.maximum(
        jnp.dot(h1, w2_ref[...], preferred_element_type=jnp.float32)
        + b2_ref[...], 0.0).astype(jnp.bfloat16)
    out = jnp.dot(h2, w3_ref[...], preferred_element_type=jnp.float32) \
        + b3_ref[...]
    o_ref[...] = out.astype(o_ref.dtype)          # bf16 store: half writeback


def _batch_tiling(batch: int):
    """Pick (tile_rows, padded_batch)."""
    if batch <= _SMALL_B:
        # One block equal to the full array: legal even if batch % 8 != 0,
        # and needs no wrapper-side pad.
        return batch, batch
    if batch <= 2 * _MAX_TB:
        # Exactly two tiles so the "parallel" batch axis can shard across both
        # v7x TensorCores (no effect on single-TC v5e/v6e).  16-row multiples
        # keep bf16 sublane packing clean.
        tb = _round_up(-(-batch // 2), 16)
        return tb, _round_up(batch, tb)
    # Large batch: big fixed tiles amortize the ~0.35 us/step pipeline overhead.
    return _MAX_TB, _round_up(batch, _MAX_TB)


_single_buffer_consts_ok = True  # cleared if pl.Buffered(1) is rejected


def _build_call(TB, B_pad, D_in, H_pad, C_pad, flops, bytes_accessed,
                single_buffer_consts):
    if single_buffer_consts:
        # Constant index_map -> fetched once; single buffer halves their VMEM.
        const = lambda shape: pl.BlockSpec(shape, lambda i: (0, 0),
                                           pipeline_mode=pl.Buffered(1))
    else:
        const = lambda shape: pl.BlockSpec(shape, lambda i: (0, 0))

    # NOTE: if C_pad ever grows large (>~2048, e.g. huge num_classes), add a
    # second grid axis over classes and block w3/b3/out along N to stay inside
    # v7x's 64 MiB VMEM.  Not needed at these sizes.
    return pl.pallas_call(
        _proj_mlp_kernel,
        out_shape=jax.ShapeDtypeStruct((B_pad, C_pad), jnp.bfloat16),
        grid_spec=pltpu.PrefetchScalarGridSpec(
            num_scalar_prefetch=0,
            grid=(B_pad // TB,),
            in_specs=[
                pl.BlockSpec((TB, D_in), lambda i: (i, 0)),    # embedding tile
                const((D_in, H_pad)), const((1, H_pad)),       # layer 1
                const((H_pad, H_pad)), const((1, H_pad)),      # layer 2
                const((H_pad, C_pad)), const((1, C_pad)),      # layer 3
            ],
            out_specs=pl.BlockSpec((TB, C_pad), lambda i: (i, 0)),
        ),
        compiler_params=pltpu.CompilerParams(
            dimension_semantics=("parallel",),     # batch axis (v7x 2 TCs)
        ),
        cost_estimate=pl.CostEstimate(
            flops=flops, transcendentals=0, bytes_accessed=bytes_accessed),
    )


def proj_mlp(embed, params, num_classes: int):
    """Run the projection head on a (B, 512) embedding -> (B, num_classes) bf16."""
    global _single_buffer_consts_ok
    w1, b1, w2, b2, w3, b3 = params
    B, D_in = embed.shape
    H_pad = w1.shape[1]
    C_pad = w3.shape[1]

    TB, B_pad = _batch_tiling(B)
    x = embed                                     # stays f32; cast in-kernel
    if B_pad != B:
        x = jnp.pad(x, ((0, B_pad - B), (0, 0)))  # only for multi-tile batches

    flops = 2 * B_pad * (D_in * H_pad + H_pad * H_pad + H_pad * C_pad)
    bytes_accessed = (
        B_pad * D_in * 4                                   # x (f32 in)
        + (w1.size + w2.size + w3.size) * 2                # weights (bf16)
        + (b1.size + b2.size + b3.size) * 4                # biases (f32)
        + B_pad * C_pad * 2                                # output (bf16)
    )

    args = (x, w1, b1, w2, b2, w3, b3)
    out = None
    if _single_buffer_consts_ok:
        try:
            out = _build_call(TB, B_pad, D_in, H_pad, C_pad,
                              flops, bytes_accessed, True)(*args)
        except Exception:
            _single_buffer_consts_ok = False
    if out is None:
        out = _build_call(TB, B_pad, D_in, H_pad, C_pad,
                          flops, bytes_accessed, False)(*args)

    return out[:B, :num_classes]


# ----------------------------------------------------------------------------
# Wav2CLIP module (JAX glue + Pallas hot path)
# ----------------------------------------------------------------------------
class Wav2CLIPPallas:
    def __init__(self, num_classes: int, sample_rate: float,
                 hidden_dim: int = 256, key=None):
        assert sample_rate == 16000, \
            "resample implemented as identity (orig_freq == new_freq)"
        self.num_classes = num_classes
        self.hidden_dim = hidden_dim
        if key is None:
            key = jax.random.PRNGKey(0)
        k1, k2, k3, k4, k5, k6 = jax.random.split(key, 6)

        D_in = 512
        H_pad = _round_up(hidden_dim, _LANE)
        C_pad = _round_up(num_classes, _LANE)

        def init_linear(kw, kb, fan_in, fan_out, in_pad, out_pad):
            # PyTorch-Linear-style uniform init; weight stored (in, out), then
            # zero-padded to lane-dense shapes; weight -> bf16 (MXU), bias -> f32.
            bound = 1.0 / math.sqrt(fan_in)
            w = jax.random.uniform(kw, (fan_in, fan_out), jnp.float32,
                                   -bound, bound)
            b = jax.random.uniform(kb, (1, fan_out), jnp.float32, -bound, bound)
            w = jnp.pad(w, ((0, in_pad - fan_in), (0, out_pad - fan_out)))
            b = jnp.pad(b, ((0, 0), (0, out_pad - fan_out)))
            return w.astype(jnp.bfloat16), b

        w1, b1 = init_linear(k1, k2, D_in, hidden_dim, D_in, H_pad)
        w2, b2 = init_linear(k3, k4, hidden_dim, hidden_dim, H_pad, H_pad)
        w3, b3 = init_linear(k5, k6, hidden_dim, num_classes, H_pad, C_pad)
        self.params = (w1, b1, w2, b2, w3, b3)

    def forward(self, x, embed):
        # x: raw audio (B, T).  Resample is identity (16 kHz -> 16 kHz).
        x = x.reshape(x.shape[0], -1)         # x.view(B, -1)
        del x
        # TODO(synk): wav2clip_hear.get_scene_embeddings (frozen pretrained
        # encoder) is not translatable; `embed` (B, 512) stands in for its output.
        return proj_mlp(embed, self.params, self.num_classes)


# ----------------------------------------------------------------------------
if __name__ == "__main__":
    key = jax.random.PRNGKey(0)
    k_audio, k_embed, k_params = jax.random.split(key, 3)

    B = 2                 # batch
    T = 4096              # small audio length
    NUM_CLASSES = 8
    HIDDEN = 32           # small hidden_dim (module default is 256)

    x_audio = jax.random.normal(k_audio, (B, T), jnp.float32)
    # stand-in for the frozen wav2clip scene embedding (always 512-d)
    embed = jax.random.normal(k_embed, (B, 512), jnp.float32)

    model = Wav2CLIPPallas(num_classes=NUM_CLASSES, sample_rate=16000,
                           hidden_dim=HIDDEN, key=k_params)

    out = model.forward(x_audio, embed)
    out = jax.block_until_ready(out)

    # reference check in plain JAX (same bf16-in / f32-accumulate numerics;
    # kernel output is bf16, compare with a tolerance covering that rounding)
    w1, b1, w2, b2, w3, b3 = model.params
    xb = embed.astype(jnp.bfloat16)
    h1 = jnp.maximum(
        jnp.dot(xb, w1, preferred_element_type=jnp.float32) + b1,
        0.0).astype(jnp.bfloat16)
    h2 = jnp.maximum(
        jnp.dot(h1, w2, preferred_element_type=jnp.float32) + b2,
        0.0).astype(jnp.bfloat16)
    ref = (jnp.dot(h2, w3, preferred_element_type=jnp.float32)
           + b3)[:, :NUM_CLASSES]

    assert out.shape == (B, NUM_CLASSES)
    assert jnp.allclose(out.astype(jnp.float32), ref, atol=5e-2, rtol=5e-2)

    print("KERNEL_OK")
</pallas_src>

<mosaic_0001>
module attributes {stable_mosaic.version = 11 : i64} {
  func.func @_proj_mlp_kernel(%arg0: i32, %arg1: memref<2x512xf32, #tpu.memory_space<vmem>>, %arg2: memref<512x128xbf16, #tpu.memory_space<vmem>>, %arg3: memref<1x128xf32, #tpu.memory_space<vmem>>, %arg4: memref<128x128xbf16, #tpu.memory_space<vmem>>, %arg5: memref<1x128xf32, #tpu.memory_space<vmem>>, %arg6: memref<128x128xbf16, #tpu.memory_space<vmem>>, %arg7: memref<1x128xf32, #tpu.memory_space<vmem>>, %arg8: memref<2x128xbf16, #tpu.memory_space<vmem>>) attributes {dimension_semantics = [#tpu.dimension_semantics<parallel>], iteration_bounds = array<i64: 1>, scalar_prefetch = 0 : i64, scratch_operands = 0 : i64, tpu.core_type = #tpu.core_type<tc>, window_params = [{transform_indices = @transform_0, window_bounds = array<i64: 2, 512>}, {pipeline_mode = #tpu.pipeline_mode<synchronous>, transform_indices = @transform_1, window_bounds = array<i64: 512, 128>}, {pipeline_mode = #tpu.pipeline_mode<synchronous>, transform_indices = @transform_2, window_bounds = array<i64: 1, 128>}, {pipeline_mode = #tpu.pipeline_mode<synchronous>, transform_indices = @transform_3, window_bounds = array<i64: 128, 128>}, {pipeline_mode = #tpu.pipeline_mode<synchronous>, transform_indices = @transform_4, window_bounds = array<i64: 1, 128>}, {pipeline_mode = #tpu.pipeline_mode<synchronous>, transform_indices = @transform_5, window_bounds = array<i64: 128, 128>}, {pipeline_mode = #tpu.pipeline_mode<synchronous>, transform_indices = @transform_6, window_bounds = array<i64: 1, 128>}, {transform_indices = @transform_7, window_bounds = array<i64: 2, 128>}]} {
    %c0 = arith.constant 0 : index
    %c0_0 = arith.constant 0 : index
    %0 = vector.load %arg1[%c0, %c0_0] : memref<2x512xf32, #tpu.memory_space<vmem>>, vector<2x512xf32>
    %1 = arith.truncf %0 : vector<2x512xf32> to vector<2x512xbf16>
    %c0_1 = arith.constant 0 : index
    %c0_2 = arith.constant 0 : index
    %2 = vector.load %arg2[%c0_1, %c0_2] : memref<512x128xbf16, #tpu.memory_space<vmem>>, vector<512x128xbf16>
    %cst = arith.constant dense<0.000000e+00> : vector<2x128xf32>
    %3 = tpu.matmul %1, %2, %cst {dimension_numbers = #tpu.dot_dimension_numbers<[1], [0], [0], [1], [0, 0, 1, 1], [], []>} : vector<2x512xbf16>, vector<512x128xbf16>, vector<2x128xf32> -> vector<2x128xf32>
    %c0_3 = arith.constant 0 : index
    %c0_4 = arith.constant 0 : index
    %4 = vector.load %arg3[%c0_3, %c0_4] : memref<1x128xf32, #tpu.memory_space<vmem>>, vector<1x128xf32>
    %5 = vector.broadcast %4 : vector<1x128xf32> to vector<2x128xf32>
    %6 = arith.addf %3, %5 : vector<2x128xf32>
    %cst_5 = arith.constant 0.000000e+00 : f32
    %7 = vector.broadcast %cst_5 : f32 to vector<2x128xf32>
    %8 = arith.maximumf %6, %7 : vector<2x128xf32>
    %9 = arith.truncf %8 : vector<2x128xf32> to vector<2x128xbf16>
    %c0_6 = arith.constant 0 : index
    %c0_7 = arith.constant 0 : index
    %10 = vector.load %arg4[%c0_6, %c0_7] : memref<128x128xbf16, #tpu.memory_space<vmem>>, vector<128x128xbf16>
    %cst_8 = arith.constant dense<0.000000e+00> : vector<2x128xf32>
    %11 = tpu.matmul %9, %10, %cst_8 {dimension_numbers = #tpu.dot_dimension_numbers<[1], [0], [0], [1], [0, 0, 1, 1], [], []>} : vector<2x128xbf16>, vector<128x128xbf16>, vector<2x128xf32> -> vector<2x128xf32>
    %c0_9 = arith.constant 0 : index
    %c0_10 = arith.constant 0 : index
    %12 = vector.load %arg5[%c0_9, %c0_10] : memref<1x128xf32, #tpu.memory_space<vmem>>, vector<1x128xf32>
    %13 = vector.broadcast %12 : vector<1x128xf32> to vector<2x128xf32>
    %14 = arith.addf %11, %13 : vector<2x128xf32>
    %cst_11 = arith.constant 0.000000e+00 : f32
    %15 = vector.broadcast %cst_11 : f32 to vector<2x128xf32>
    %16 = arith.maximumf %14, %15 : vector<2x128xf32>
    %17 = arith.truncf %16 : vector<2x128xf32> to vector<2x128xbf16>
    %c0_12 = arith.constant 0 : index
    %c0_13 = arith.constant 0 : index
    %18 = vector.load %arg6[%c0_12, %c0_13] : memref<128x128xbf16, #tpu.memory_space<vmem>>, vector<128x128xbf16>
    %cst_14 = arith.constant dense<0.000000e+00> : vector<2x128xf32>
    %19 = tpu.matmul %17, %18, %cst_14 {dimension_numbers = #tpu.dot_dimension_numbers<[1], [0], [0], [1], [0, 0, 1, 1], [], []>} : vector<2x128xbf16>, vector<128x128xbf16>, vector<2x128xf32> -> vector<2x128xf32>
    %c0_15 = arith.constant 0 : index
    %c0_16 = arith.constant 0 : index
    %20 = vector.load %arg7[%c0_15, %c0_16] : memref<1x128xf32, #tpu.memory_space<vmem>>, vector<1x128xf32>
    %21 = vector.broadcast %20 : vector<1x128xf32> to vector<2x128xf32>
    %22 = arith.addf %19, %21 : vector<2x128xf32>
    %23 = arith.truncf %22 : vector<2x128xf32> to vector<2x128xbf16>
    %c0_17 = arith.constant 0 : index
    %c0_18 = arith.constant 0 : index
    %24 = vector.load %arg8[%c0_17, %c0_18] : memref<2x128xbf16, #tpu.memory_space<vmem>>, vector<2x128xbf16>
    tpu.vector_store %arg8[%c0_17, %c0_18], %23 {strides = array<i32>} : memref<2x128xbf16, #tpu.memory_space<vmem>>, vector<2x128xbf16>,
    return
  }
  func.func @transform_0(%arg0: i32) -> (i32, i32) {
    %c0_i32 = arith.constant 0 : i32
    %c0_i32_0 = arith.constant 0 : i32
    return %arg0, %c0_i32 : i32, i32
  }
  func.func @transform_1(%arg0: i32) -> (i32, i32) {
    %c0_i32 = arith.constant 0 : i32
    %c0_i32_0 = arith.constant 0 : i32
    %c0_i32_1 = arith.constant 0 : i32
    return %c0_i32, %c0_i32_0 : i32, i32
  }
  func.func @transform_2(%arg0: i32) -> (i32, i32) {
    %c0_i32 = arith.constant 0 : i32
    %c0_i32_0 = arith.constant 0 : i32
    %c0_i32_1 = arith.constant 0 : i32
    return %c0_i32, %c0_i32_0 : i32, i32
  }
  func.func @transform_3(%arg0: i32) -> (i32, i32) {
    %c0_i32 = arith.constant 0 : i32
    %c0_i32_0 = arith.constant 0 : i32
    %c0_i32_1 = arith.constant 0 : i32
    return %c0_i32, %c0_i32_0 : i32, i32
  }
  func.func @transform_4(%arg0: i32) -> (i32, i32) {
    %c0_i32 = arith.constant 0 : i32
    %c0_i32_0 = arith.constant 0 : i32
    %c0_i32_1 = arith.constant 0 : i32
    return %c0_i32, %c0_i32_0 : i32, i32
  }
  func.func @transform_5(%arg0: i32) -> (i32, i32) {
    %c0_i32 = arith.constant 0 : i32
    %c0_i32_0 = arith.constant 0 : i32
    %c0_i32_1 = arith.constant 0 : i32
    return %c0_i32, %c0_i32_0 : i32, i32
  }
  func.func @transform_6(%arg0: i32) -> (i32, i32) {
    %c0_i32 = arith.constant 0 : i32
    %c0_i32_0 = arith.constant 0 : i32
    %c0_i32_1 = arith.constant 0 : i32
    return %c0_i32, %c0_i32_0 : i32, i32
  }
  func.func @transform_7(%arg0: i32) -> (i32, i32) {
    %c0_i32 = arith.constant 0 : i32
    %c0_i32_0 = arith.constant 0 : i32
    return %arg0, %c0_i32 : i32, i32
  }
}

module attributes {stable_mosaic.version = 11 : i64} {
  func.func @_proj_mlp_kernel(%arg0: i32, %arg1: memref<2x512xf32, #tpu.memory_space<vmem>>, %arg2: memref<512x128xbf16, #tpu.memory_space<vmem>>, %arg3: memref<1x128xf32, #tpu.memory_space<vmem>>, %arg4: memref<128x128xbf16, #tpu.memory_space<vmem>>, %arg5: memref<1x128xf32, #tpu.memory_space<vmem>>, %arg6: memref<128x128xbf16, #tpu.memory_space<vmem>>, %arg7: memref<1x128xf32, #tpu.memory_space<vmem>>, %arg8: memref<2x128xbf16, #tpu.memory_space<vmem>>) attributes {dimension_semantics = [#tpu.dimension_semantics<parallel>], iteration_bounds = array<i64: 1>, scalar_prefetch = 0 : i64, scratch_operands = 0 : i64, tpu.core_type = #tpu.core_type<tc>, window_params = [{transform_indices = @transform_0, window_bounds = array<i64: 2, 512>}, {pipeline_mode = #tpu.pipeline_mode<synchronous>, transform_indices = @transform_1, window_bounds = array<i64: 512, 128>}, {pipeline_mode = #tpu.pipeline_mode<synchronous>, transform_indices = @transform_2, window_bounds = array<i64: 1, 128>}, {pipeline_mode = #tpu.pipeline_mode<synchronous>, transform_indices = @transform_3, window_bounds = array<i64: 128, 128>}, {pipeline_mode = #tpu.pipeline_mode<synchronous>, transform_indices = @transform_4, window_bounds = array<i64: 1, 128>}, {pipeline_mode = #tpu.pipeline_mode<synchronous>, transform_indices = @transform_5, window_bounds = array<i64: 128, 128>}, {pipeline_mode = #tpu.pipeline_mode<synchronous>, transform_indices = @transform_6, window_bounds = array<i64: 1, 128>}, {transform_indices = @transform_7, window_bounds = array<i64: 2, 128>}]} {
    %c0 = arith.constant 0 : index
    %c0_0 = arith.constant 0 : index
    %0 = vector.load %arg1[%c0, %c0_0] : memref<2x512xf32, #tpu.memory_space<vmem>>, vector<2x512xf32>
    %1 = arith.truncf %0 : vector<2x512xf32> to vector<2x512xbf16>
    %c0_1 = arith.constant 0 : index
    %c0_2 = arith.constant 0 : index
    %2 = vector.load %arg2[%c0_1, %c0_2] : memref<512x128xbf16, #tpu.memory_space<vmem>>, vector<512x128xbf16>
    %cst = arith.constant dense<0.000000e+00> : vector<2x128xf32>
    %3 = tpu.matmul %1, %2, %cst {dimension_numbers = #tpu.dot_dimension_numbers<[1], [0], [0], [1], [0, 0, 1, 1], [], []>} : vector<2x512xbf16>, vector<512x128xbf16>, vector<2x128xf32> -> vector<2x128xf32>
    %c0_3 = arith.constant 0 : index
    %c0_4 = arith.constant 0 : index
    %4 = vector.load %arg3[%c0_3, %c0_4] : memref<1x128xf32, #tpu.memory_space<vmem>>, vector<1x128xf32>
    %5 = vector.broadcast %4 : vector<1x128xf32> to vector<2x128xf32>
    %6 = arith.addf %3, %5 : vector<2x128xf32>
    %cst_5 = arith.constant 0.000000e+00 : f32
    %7 = vector.broadcast %cst_5 : f32 to vector<2x128xf32>
    %8 = arith.maximumf %6, %7 : vector<2x128xf32>
    %9 = arith.truncf %8 : vector<2x128xf32> to vector<2x128xbf16>
    %c0_6 = arith.constant 0 : index
    %c0_7 = arith.constant 0 : index
    %10 = vector.load %arg4[%c0_6, %c0_7] : memref<128x128xbf16, #tpu.memory_space<vmem>>, vector<128x128xbf16>
    %cst_8 = arith.constant dense<0.000000e+00> : vector<2x128xf32>
    %11 = tpu.matmul %9, %10, %cst_8 {dimension_numbers = #tpu.dot_dimension_numbers<[1], [0], [0], [1], [0, 0, 1, 1], [], []>} : vector<2x128xbf16>, vector<128x128xbf16>, vector<2x128xf32> -> vector<2x128xf32>
    %c0_9 = arith.constant 0 : index
    %c0_10 = arith.constant 0 : index
    %12 = vector.load %arg5[%c0_9, %c0_10] : memref<1x128xf32, #tpu.memory_space<vmem>>, vector<1x128xf32>
    %13 = vector.broadcast %12 : vector<1x128xf32> to vector<2x128xf32>
    %14 = arith.addf %11, %13 : vector<2x128xf32>
    %cst_11 = arith.constant 0.000000e+00 : f32
    %15 = vector.broadcast %cst_11 : f32 to vector<2x128xf32>
    %16 = arith.maximumf %14, %15 : vector<2x128xf32>
    %17 = arith.truncf %16 : vector<2x128xf32> to vector<2x128xbf16>
    %c0_12 = arith.constant 0 : index
    %c0_13 = arith.constant 0 : index
    %18 = vector.load %arg6[%c0_12, %c0_13] : memref<128x128xbf16, #tpu.memory_space<vmem>>, vector<128x128xbf16>
    %cst_14 = arith.constant dense<0.000000e+00> : vector<2x128xf32>
    %19 = tpu.matmul %17, %18, %cst_14 {dimension_numbers = #tpu.dot_dimension_numbers<[1], [0], [0], [1], [0, 0, 1, 1], [], []>} : vector<2x128xbf16>, vector<128x128xbf16>, vector<2x128xf32> -> vector<2x128xf32>
    %c0_15 = arith.constant 0 : index
    %c0_16 = arith.constant 0 : index
    %20 = vector.load %arg7[%c0_15, %c0_16] : memref<1x128xf32, #tpu.memory_space<vmem>>, vector<1x128xf32>
    %21 = vector.broadcast %20 : vector<1x128xf32> to vector<2x128xf32>
    %22 = arith.addf %19, %21 : vector<2x128xf32>
    %23 = arith.truncf %22 : vector<2x128xf32> to vector<2x128xbf16>
    %c0_17 = arith.constant 0 : index
    %c0_18 = arith.constant 0 : index
    %24 = vector.load %arg8[%c0_17, %c0_18] : memref<2x128xbf16, #tpu.memory_space<vmem>>, vector<2x128xbf16>
    tpu.vector_store %arg8[%c0_17, %c0_18], %23 {strides = array<i32>} : memref<2x128xbf16, #tpu.memory_space<vmem>>, vector<2x128xbf16>,
    return
  }
  func.func @transform_0(%arg0: i32) -> (i32, i32) {
    %c0_i32 = arith.constant 0 : i32
    %c0_i32_0 = arith.constant 0 : i32
    return %arg0, %c0_i32 : i32, i32
  }
  func.func @transform_1(%arg0: i32) -> (i32, i32) {
    %c0_i32 = arith.constant 0 : i32
    %c0_i32_0 = arith.constant 0 : i32
    %c0_i32_1 = arith.constant 0 : i32
    return %c0_i32, %c0_i32_0 : i32, i32
  }
  func.func @transform_2(%arg0: i32) -> (i32, i32) {
    %c0_i32 = arith.constant 0 : i32
    %c0_i32_0 = arith.constant 0 : i32
    %c0_i32_1 = arith.constant 0 : i32
    return %c0_i32, %c0_i32_0 : i32, i32
  }
  func.func @transform_3(%arg0: i32) -> (i32, i32) {
    %c0_i32 = arith.constant 0 : i32
    %c0_i32_0 = arith.constant 0 : i32
    %c0_i32_1 = arith.constant 0 : i32
    return %c0_i32, %c0_i32_0 : i32, i32
  }
  func.func @transform_4(%arg0: i32) -> (i32, i32) {
    %c0_i32 = arith.constant 0 : i32
    %c0_i32_0 = arith.constant 0 : i32
    %c0_i32_1 = arith.constant 0 : i32
    return %c0_i32, %c0_i32_0 : i32, i32
  }
  func.func @transform_5(%arg0: i32) -> (i32, i32) {
    %c0_i32 = arith.constant 0 : i32
    %c0_i32_0 = arith.constant 0 : i32
    %c0_i32_1 = arith.constant 0 : i32
    return %c0_i32, %c0_i32_0 : i32, i32
  }
  func.func @transform_6(%arg0: i32) -> (i32, i32) {
    %c0_i32 = arith.constant 0 : i32
    %c0_i32_0 = arith.constant 0 : i32
    %c0_i32_1 = arith.constant 0 : i32
    return %c0_i32, %c0_i32_0 : i32, i32
  }
  func.func @transform_7(%arg0: i32) -> (i32, i32) {
    %c0_i32 = arith.constant 0 : i32
    %c0_i32_0 = arith.constant 0 : i32
    return %arg0, %c0_i32 : i32, i32
  }
}

</mosaic_0001>

<llo_original>
// kernel: tpu_custom_call.1
$region0: #{tpu_custom_call.1}
  #allocation0 [shape = 'u32[]', space=smem, size = 0x4, offset = 0x4, fixed_abs, tag = 'smem constant byte address 0x4 - core index']
  #allocation1 [shape = 'u32[144,128]{1,0:T(1,128)}', space=vmem, size = 0x12000, scoped, tag = 'internal scratch']
  %s0 = inlined_call_operand.hbm [shape: f32[2,512], index: 0, kind: input, shape index: {}]
  %s1 = inlined_call_operand.hbm [shape: bf16[512,128], index: 1, kind: input, shape index: {}]
  %s2 = inlined_call_operand.vmem [shape: f32[1,128], index: 2, kind: input, shape index: {}]
  %s3 = inlined_call_operand.hbm [shape: bf16[128,128], index: 3, kind: input, shape index: {}]
  %s4 = inlined_call_operand.vmem [shape: f32[1,128], index: 4, kind: input, shape index: {}]
  %s5 = inlined_call_operand.hbm [shape: bf16[128,128], index: 5, kind: input, shape index: {}]
  %s6 = inlined_call_operand.vmem [shape: f32[1,128], index: 6, kind: input, shape index: {}]
  %s7 = inlined_call_operand.hbm [shape: bf16[2,128], index: 7, kind: output, shape index: {}]
  %s8 = sld [smem:[#allocation0]]
  $region54: #{tpu_custom_call.1} parent=0
    _
  %s10 = ssub.s32 1, %s8
  %s11 = scalar_select 0, %s10, %s8
  $region1: #{tpu_custom_call.1} parent=0
    #allocation2 [shape = 'u8[4096]{0}', space=vmem, size = 0x1000, scoped, tag = 'input window, operand 0, single buffered']
    #allocation3 [shape = 's32[1]{0}', space=sflag, size = 0x4, scoped, tag = 'scoped memory for tpu_custom_call.1']
    #allocation4 [shape = 's32[1]{0}', space=sflag, size = 0x4, scoped, tag = 'scoped memory for tpu_custom_call.1']
    #allocation5 [shape = 'u8[131072]{0}', space=vmem, size = 0x20000, scoped, tag = 'input window, operand 1, single buffered']
    #allocation6 [shape = 's32[1]{0}', space=sflag, size = 0x4, scoped, tag = 'scoped memory for tpu_custom_call.1']
    #allocation7 [shape = 'u8[32768]{0}', space=vmem, size = 0x8000, scoped, tag = 'input window, operand 3, single buffered']
    #allocation8 [shape = 'u8[32768]{0}', space=vmem, size = 0x8000, scoped, tag = 'input window, operand 5, single buffered']
    #allocation9 [shape = 's32[1]{0}', space=sflag, size = 0x4, scoped, tag = 'scoped memory for tpu_custom_call.1']
    #allocation10 [shape = 'u8[512]{0}', space=vmem, size = 0x400, scoped, tag = 'output window, operand 0, single buffered']
    %12 = vsyncpa [#allocation3], 0
    %13 = vsyncpa [#allocation6], 0
    %14 = vsyncpa [#allocation9], 0
    %15 = vsyncpa [#allocation4], 0
    // Predicated region
    $region2: #{tpu_custom_call.1} parent=1 // pred_check
      _
    $region3: #{tpu_custom_call.1} parent=1 // pred_check_branch
      %17 = sbr.rel (0) target = $region5
    $region4: #{tpu_custom_call.1} parent=1 // pred_region
      %s19 = ssub.s32 128, 128
      %20 = vsyncadd [#allocation3], %s19
      %s22 = sshll.u32 [#allocation2], 4
      %s23 = int_to_ptr.vmem [resolvable:$true] %s22
      %25 = dma.hbm_to_vmem [thread:$0]  %s0, 128, %s23, [#allocation3]
    $region5: #{tpu_custom_call.1} parent=1 // pred_fallthru
      _
    // Predicated region
    $region6: #{tpu_custom_call.1} parent=1 // pred_check
      _
    $region7: #{tpu_custom_call.1} parent=1 // pred_check_branch
      %27 = sbr.rel (0) target = $region9
    $region8: #{tpu_custom_call.1} parent=1 // pred_region
      %s29 = ssub.s32 4096, 4096
      %30 = vsyncadd [#allocation6], %s29
      %s31 = sshll.u32 [#allocation5], 4
      %s32 = int_to_ptr.vmem [resolvable:$true] %s31
      %37 = dma.hbm_to_vmem [thread:$0]  %s1, 4096, %s32, [#allocation6], 64, 64, 4
    $region9: #{tpu_custom_call.1} parent=1 // pred_fallthru
      _
    // Predicated region
    $region10: #{tpu_custom_call.1} parent=1 // pred_check
      _
    $region11: #{tpu_custom_call.1} parent=1 // pred_check_branch
      %39 = sbr.rel (0) target = $region13
    $region12: #{tpu_custom_call.1} parent=1 // pred_region
      _
    $region13: #{tpu_custom_call.1} parent=1 // pred_fallthru
      _
    // Predicated region
    $region14: #{tpu_custom_call.1} parent=1 // pred_check
      _
    $region15: #{tpu_custom_call.1} parent=1 // pred_check_branch
      %41 = sbr.rel (0) target = $region17
    $region16: #{tpu_custom_call.1} parent=1 // pred_region
      %s43 = ssub.s32 1024, 1024
      %44 = vsyncadd [#allocation6], %s43
      %s45 = sshll.u32 [#allocation7], 4
      %s46 = int_to_ptr.vmem [resolvable:$true] %s45
      %51 = dma.hbm_to_vmem [thread:$0]  %s3, 1024, %s46, [#allocation6], 64, 64, 4
    $region17: #{tpu_custom_call.1} parent=1 // pred_fallthru
      _
    // Predicated region
    $region18: #{tpu_custom_call.1} parent=1 // pred_check
      _
    $region19: #{tpu_custom_call.1} parent=1 // pred_check_branch
      %53 = sbr.rel (0) target = $region21
    $region20: #{tpu_custom_call.1} parent=1 // pred_region
      _
    $region21: #{tpu_custom_call.1} parent=1 // pred_fallthru
      _
    // Predicated region
    $region22: #{tpu_custom_call.1} parent=1 // pred_check
      _
    $region23: #{tpu_custom_call.1} parent=1 // pred_check_branch
      %55 = sbr.rel (0) target = $region25
    $region24: #{tpu_custom_call.1} parent=1 // pred_region
      %s57 = ssub.s32 1024, 1024
      %58 = vsyncadd [#allocation9], %s57
      %s59 = sshll.u32 [#allocation8], 4
      %s60 = int_to_ptr.vmem [resolvable:$true] %s59
      %65 = dma.hbm_to_vmem [thread:$0]  %s5, 1024, %s60, [#allocation9], 64, 64, 4
    $region25: #{tpu_custom_call.1} parent=1 // pred_fallthru
      _
    // Predicated region
    $region26: #{tpu_custom_call.1} parent=1 // pred_check
      _
    $region27: #{tpu_custom_call.1} parent=1 // pred_check_branch
      %67 = sbr.rel (0) target = $region29
    $region28: #{tpu_custom_call.1} parent=1 // pred_region
      _
    $region29: #{tpu_custom_call.1} parent=1 // pred_fallthru
      _
    // Predicated region
    $region30: #{tpu_custom_call.1} parent=1 // pred_check
      _
    $region31: #{tpu_custom_call.1} parent=1 // pred_check_branch
      %69 = sbr.rel (0) target = $region33
    $region32: #{tpu_custom_call.1} parent=1 // pred_region
      %70 = dma.done [#allocation3], 128
    $region33: #{tpu_custom_call.1} parent=1 // pred_fallthru
      _
    // Predicated region
    $region34: #{tpu_custom_call.1} parent=1 // pred_check
      _
    $region35: #{tpu_custom_call.1} parent=1 // pred_check_branch
      %72 = sbr.rel (0) target = $region37
    $region36: #{tpu_custom_call.1} parent=1 // pred_region
      %73 = dma.done [#allocation6], 4096
    $region37: #{tpu_custom_call.1} parent=1 // pred_fallthru
      _
    // Predicated region
    $region38: #{tpu_custom_call.1} parent=1 // pred_check
      _
    $region39: #{tpu_custom_call.1} parent=1 // pred_check_branch
      %75 = sbr.rel (0) target = $region41
    $region40: #{tpu_custom_call.1} parent=1 // pred_region
      %76 = dma.done [#allocation6], 1024
    $region41: #{tpu_custom_call.1} parent=1 // pred_fallthru
      _
    // Predicated region
    $region42: #{tpu_custom_call.1} parent=1 // pred_check
      _
    $region43: #{tpu_custom_call.1} parent=1 // pred_check_branch
      %78 = sbr.rel (0) target = $region45
    $region44: #{tpu_custom_call.1} parent=1 // pred_region
      %79 = dma.done [#allocation9], 1024
    $region45: #{tpu_custom_call.1} parent=1 // pred_fallthru
      _
    %v81 = vld [vmem:[#allocation2] sm:$0xff]
    %v83 = vcombine.high %v81, %v81
    %v85 = vunpack.c.l.s4 1983009808
    %v86 = vunpack.c.0.s8 %v85
    %v87 = vlaneseq
    %v88 = vshrl.u32 %v87, 7
    %v89 = vsub.s32 %v86, %v88
    %v90 = vrot.slane %v81, %v89
    %v92 = vunpack.c.l.s4 1983009808
    %v93 = vunpack.c.0.s8 %v92
    %v94 = vlaneseq
    %v95 = vshrl.u32 %v94, 7
    %v96 = vsub.s32 %v93, %v95
    %v97 = vrot.slane %v83, %v96
    %v98 = vcombine.high %v90, %v90
    %v99 = vcombine.high %v97, %v97
    %v104 = vpack.c.bf16 %v90, %v90
    %v105 = vpack.c.bf16 %v98, %v98
    %v106 = vpack.c.bf16 %v97, %v97
    %v107 = vpack.c.bf16 %v99, %v99
    %v108 = vld [vmem:[#allocation5] sm:$0xf]
    %v109 = vld [vmem:[#allocation5 + $0x4] sm:$0xf]
    %v110 = vld [vmem:[#allocation5 + $0x8] sm:$0xf]
    %v111 = vld [vmem:[#allocation5 + $0xc] sm:$0xf]
    %v112 = vld [vmem:[#allocation5 + $0x10] sm:$0xf]
    %v113 = vld [vmem:[#allocation5 + $0x14] sm:$0xf]
    %v114 = vld [vmem:[#allocation5 + $0x18] sm:$0xf]
    %v115 = vld [vmem:[#allocation5 + $0x1c] sm:$0xf]
    %v116 = vld [vmem:[#allocation5 + $0x20] sm:$0xf]
    %v117 = vld [vmem:[#allocation5 + $0x24] sm:$0xf]
    %v118 = vld [vmem:[#allocation5 + $0x28] sm:$0xf]
    %v119 = vld [vmem:[#allocation5 + $0x2c] sm:$0xf]
    %v120 = vld [vmem:[#allocation5 + $0x30] sm:$0xf]
    %v121 = vld [vmem:[#allocation5 + $0x34] sm:$0xf]
    %v122 = vld [vmem:[#allocation5 + $0x38] sm:$0xf]
    %v123 = vld [vmem:[#allocation5 + $0x3c] sm:$0xf]
    %v124 = vld [vmem:[#allocation5 + $0x40] sm:$0xf]
    %v125 = vld [vmem:[#allocation5 + $0x44] sm:$0xf]
    %v126 = vld [vmem:[#allocation5 + $0x48] sm:$0xf]
    %v127 = vld [vmem:[#allocation5 + $0x4c] sm:$0xf]
    %v128 = vld [vmem:[#allocation5 + $0x50] sm:$0xf]
    %v129 = vld [vmem:[#allocation5 + $0x54] sm:$0xf]
    %v130 = vld [vmem:[#allocation5 + $0x58] sm:$0xf]
    %v131 = vld [vmem:[#allocation5 + $0x5c] sm:$0xf]
    %v132 = vld [vmem:[#allocation5 + $0x60] sm:$0xf]
    %v133 = vld [vmem:[#allocation5 + $0x64] sm:$0xf]
    %v134 = vld [vmem:[#allocation5 + $0x68] sm:$0xf]
    %v135 = vld [vmem:[#allocation5 + $0x6c] sm:$0xf]
    %v136 = vld [vmem:[#allocation5 + $0x70] sm:$0xf]
    %v137 = vld [vmem:[#allocation5 + $0x74] sm:$0xf]
    %v138 = vld [vmem:[#allocation5 + $0x78] sm:$0xf]
    %v139 = vld [vmem:[#allocation5 + $0x7c] sm:$0xf]
    %v140 = vld [vmem:[#allocation5 + $0x80] sm:$0xf]
    %v141 = vld [vmem:[#allocation5 + $0x84] sm:$0xf]
    %v142 = vld [vmem:[#allocation5 + $0x88] sm:$0xf]
    %v143 = vld [vmem:[#allocation5 + $0x8c] sm:$0xf]
    %v144 = vld [vmem:[#allocation5 + $0x90] sm:$0xf]
    %v145 = vld [vmem:[#allocation5 + $0x94] sm:$0xf]
    %v146 = vld [vmem:[#allocation5 + $0x98] sm:$0xf]
    %v147 = vld [vmem:[#allocation5 + $0x9c] sm:$0xf]
    %v148 = vld [vmem:[#allocation5 + $0xa0] sm:$0xf]
    %v149 = vld [vmem:[#allocation5 + $0xa4] sm:$0xf]
    %v150 = vld [vmem:[#allocation5 + $0xa8] sm:$0xf]
    %v151 = vld [vmem:[#allocation5 + $0xac] sm:$0xf]
    %v152 = vld [vmem:[#allocation5 + $0xb0] sm:$0xf]
    %v153 = vld [vmem:[#allocation5 + $0xb4] sm:$0xf]
    %v154 = vld [vmem:[#allocation5 + $0xb8] sm:$0xf]
    %v155 = vld [vmem:[#allocation5 + $0xbc] sm:$0xf]
    %v156 = vld [vmem:[#allocation5 + $0xc0] sm:$0xf]
    %v157 = vld [vmem:[#allocation5 + $0xc4] sm:$0xf]
    %v158 = vld [vmem:[#allocation5 + $0xc8] sm:$0xf]
    %v159 = vld [vmem:[#allocation5 + $0xcc] sm:$0xf]
    %v160 = vld [vmem:[#allocation5 + $0xd0] sm:$0xf]
    %v161 = vld [vmem:[#allocation5 + $0xd4] sm:$0xf]
    %v162 = vld [vmem:[#allocation5 + $0xd8] sm:$0xf]
    %v163 = vld [vmem:[#allocation5 + $0xdc] sm:$0xf]
    %v164 = vld [vmem:[#allocation5 + $0xe0] sm:$0xf]
    %v165 = vld [vmem:[#allocation5 + $0xe4] sm:$0xf]
    %v166 = vld [vmem:[#allocation5 + $0xe8] sm:$0xf]
    %v167 = vld [vmem:[#allocation5 + $0xec] sm:$0xf]
    %v168 = vld [vmem:[#allocation5 + $0xf0] sm:$0xf]
    %v169 = vld [vmem:[#allocation5 + $0xf4] sm:$0xf]
    %v170 = vld [vmem:[#allocation5 + $0xf8] sm:$0xf]
    %v171 = vld [vmem:[#allocation5 + $0xfc] sm:$0xf]
    %v172 = vld [vmem:[%s2] sm:$0x1]
    %v174 = vlaneseq
    %v175 = vshrl.u32 %v174, 7
    %v176 = vsub.s32 0, %v175
    %v177 = vrot.slane %v172, %v176
    %v243 = vunpack.c.l.b16 %v108
    %v244 = vunpack.c.l.b16 %v109
    %v245 = vunpack.c.l.b16 %v110
    %v246 = vunpack.c.l.b16 %v111
    %v247 = vunpack.c.l.b16 %v112
    %v248 = vunpack.c.l.b16 %v113
    %v249 = vunpack.c.l.b16 %v114
    %v250 = vunpack.c.l.b16 %v115
    %v251 = vunpack.c.l.b16 %v116
    %v252 = vunpack.c.l.b16 %v117
    %v253 = vunpack.c.l.b16 %v118
    %v254 = vunpack.c.l.b16 %v119
    %v255 = vunpack.c.l.b16 %v120
    %v256 = vunpack.c.l.b16 %v121
    %v257 = vunpack.c.l.b16 %v122
    %v258 = vunpack.c.l.b16 %v123
    %v259 = vunpack.c.l.b16 %v124
    %v260 = vunpack.c.l.b16 %v125
    %v261 = vunpack.c.l.b16 %v126
    %v262 = vunpack.c.l.b16 %v127
    %v263 = vunpack.c.l.b16 %v128
    %v264 = vunpack.c.l.b16 %v129
    %v265 = vunpack.c.l.b16 %v130
    %v266 = vunpack.c.l.b16 %v131
    %v267 = vunpack.c.l.b16 %v132
    %v268 = vunpack.c.l.b16 %v133
    %v269 = vunpack.c.l.b16 %v134
    %v270 = vunpack.c.l.b16 %v135
    %v271 = vunpack.c.l.b16 %v136
    %v272 = vunpack.c.l.b16 %v137
    %v273 = vunpack.c.l.b16 %v138
    %v274 = vunpack.c.l.b16 %v139
    %v275 = vunpack.c.l.b16 %v140
    %v276 = vunpack.c.l.b16 %v141
    %v277 = vunpack.c.l.b16 %v142
    %v278 = vunpack.c.l.b16 %v143
    %v279 = vunpack.c.l.b16 %v144
    %v280 = vunpack.c.l.b16 %v145
    %v281 = vunpack.c.l.b16 %v146
    %v282 = vunpack.c.l.b16 %v147
    %v283 = vunpack.c.l.b16 %v148
    %v284 = vunpack.c.l.b16 %v149
    %v285 = vunpack.c.l.b16 %v150
    %v286 = vunpack.c.l.b16 %v151
    %v287 = vunpack.c.l.b16 %v152
    %v288 = vunpack.c.l.b16 %v153
    %v289 = vunpack.c.l.b16 %v154
    %v290 = vunpack.c.l.b16 %v155
    %v291 = vunpack.c.l.b16 %v156
    %v292 = vunpack.c.l.b16 %v157
    %v293 = vunpack.c.l.b16 %v158
    %v294 = vunpack.c.l.b16 %v159
    %v295 = vunpack.c.l.b16 %v160
    %v296 = vunpack.c.l.b16 %v161
    %v297 = vunpack.c.l.b16 %v162
    %v298 = vunpack.c.l.b16 %v163
    %v299 = vunpack.c.l.b16 %v164
    %v300 = vunpack.c.l.b16 %v165
    %v301 = vunpack.c.l.b16 %v166
    %v302 = vunpack.c.l.b16 %v167
    %v303 = vunpack.c.l.b16 %v168
    %v304 = vunpack.c.l.b16 %v169
    %v305 = vunpack.c.l.b16 %v170
    %v306 = vunpack.c.l.b16 %v171
    %v307 = vpack.c.b16 %v244, %v243
    %v308 = vpack.c.b16 %v246, %v245
    %v309 = vpack.c.b16 %v248, %v247
    %v310 = vpack.c.b16 %v250, %v249
    %v311 = vpack.c.b16 %v252, %v251
    %v312 = vpack.c.b16 %v254, %v253
    %v313 = vpack.c.b16 %v256, %v255
    %v314 = vpack.c.b16 %v258, %v257
    %v315 = vpack.c.b16 %v260, %v259
    %v316 = vpack.c.b16 %v262, %v261
    %v317 = vpack.c.b16 %v264, %v263
    %v318 = vpack.c.b16 %v266, %v265
    %v319 = vpack.c.b16 %v268, %v267
    %v320 = vpack.c.b16 %v270, %v269
    %v321 = vpack.c.b16 %v272, %v271
    %v322 = vpack.c.b16 %v274, %v273
    %v323 = vpack.c.b16 %v276, %v275
    %v324 = vpack.c.b16 %v278, %v277
    %v325 = vpack.c.b16 %v280, %v279
    %v326 = vpack.c.b16 %v282, %v281
    %v327 = vpack.c.b16 %v284, %v283
    %v328 = vpack.c.b16 %v286, %v285
    %v329 = vpack.c.b16 %v288, %v287
    %v330 = vpack.c.b16 %v290, %v289
    %v331 = vpack.c.b16 %v292, %v291
    %v332 = vpack.c.b16 %v294, %v293
    %v333 = vpack.c.b16 %v296, %v295
    %v334 = vpack.c.b16 %v298, %v297
    %v335 = vpack.c.b16 %v300, %v299
    %v336 = vpack.c.b16 %v302, %v301
    %v337 = vpack.c.b16 %v304, %v303
    %v338 = vpack.c.b16 %v306, %v305
    %371 = vmatprep.subr.bf16.mxu0 0
    %372 = vmatpush1.bf16.msra.mxu0 %v314
    %373 = vmatprep.subr.bf16.mxu0 0
    %374 = vmatpush1.bf16.msra.mxu0 %v313
    %375 = vmatprep.subr.bf16.mxu0 0
    %376 = vmatpush1.bf16.msra.mxu0 %v312
    %377 = vmatprep.subr.bf16.mxu0 0
    %378 = vmatpush1.bf16.msra.mxu0 %v311
    %379 = vmatprep.subr.bf16.mxu0 0
    %380 = vmatpush1.bf16.msra.mxu0 %v310
    %381 = vmatprep.subr.bf16.mxu0 0
    %382 = vmatpush1.bf16.msra.mxu0 %v309
    %383 = vmatprep.subr.bf16.mxu0 0
    %384 = vmatpush1.bf16.msra.mxu0 %v308
    %385 = vmatprep.subr.bf16.mxu0 0
    %386 = vmatpush1.bf16.msra.mxu0 %v307
    %387 = vmatprep.subr.bf16.mxu0 0
    %388 = vmatpush2.bf16.msra.mxu0 %v322
    %389 = vmatprep.subr.bf16.mxu0 0
    %390 = vmatpush2.bf16.msra.mxu0 %v321
    %391 = vmatprep.subr.bf16.mxu0 0
    %392 = vmatpush2.bf16.msra.mxu0 %v320
    %393 = vmatprep.subr.bf16.mxu0 0
    %394 = vmatpush2.bf16.msra.mxu0 %v319
    %395 = vmatprep.subr.bf16.mxu0 0
    %396 = vmatpush2.bf16.msra.mxu0 %v318
    %397 = vmatprep.subr.bf16.mxu0 0
    %398 = vmatpush2.bf16.msra.mxu0 %v317
    %399 = vmatprep.subr.bf16.mxu0 0
    %400 = vmatpush2.bf16.msra.mxu0 %v316
    %401 = vmatprep.subr.bf16.mxu0 0
    %402 = vmatpush2.bf16.msra.mxu0 %v315
    %403 = vmatprep.mubr.bf16.mxu0 %v105
    %404 = vmatmul.mubr.bf16.gmra.mxu0 %v104
    %v405 = vpop.f32.mrf.mxu0
    %v406 = vadd.f32 %v177, %v405
    %v407 = vpop.f32.mrf.mxu0
    %v408 = vpop.f32.mrf.mxu0
    %v409 = vpop.f32.mrf.mxu0
    %410 = vdwg.mxu0
    %411 = vmatprep.subr.bf16.mxu0 0
    %412 = vmatpush1.bf16.msra.mxu0 %v330
    %413 = vmatprep.subr.bf16.mxu0 0
    %414 = vmatpush1.bf16.msra.mxu0 %v329
    %415 = vmatprep.subr.bf16.mxu0 0
    %416 = vmatpush1.bf16.msra.mxu0 %v328
    %417 = vmatprep.subr.bf16.mxu0 0
    %418 = vmatpush1.bf16.msra.mxu0 %v327
    %419 = vmatprep.subr.bf16.mxu0 0
    %420 = vmatpush1.bf16.msra.mxu0 %v326
    %421 = vmatprep.subr.bf16.mxu0 0
    %422 = vmatpush1.bf16.msra.mxu0 %v325
    %423 = vmatprep.subr.bf16.mxu0 0
    %424 = vmatpush1.bf16.msra.mxu0 %v324
    %425 = vmatprep.subr.bf16.mxu0 0
    %426 = vmatpush1.bf16.msra.mxu0 %v323
    %427 = vmatprep.subr.bf16.mxu0 0
    %428 = vmatpush2.bf16.msra.mxu0 %v338
    %429 = vmatprep.subr.bf16.mxu0 0
    %430 = vmatpush2.bf16.msra.mxu0 %v337
    %431 = vmatprep.subr.bf16.mxu0 0
    %432 = vmatpush2.bf16.msra.mxu0 %v336
    %433 = vmatprep.subr.bf16.mxu0 0
    %434 = vmatpush2.bf16.msra.mxu0 %v335
    %435 = vmatprep.subr.bf16.mxu0 0
    %436 = vmatpush2.bf16.msra.mxu0 %v334
    %437 = vmatprep.subr.bf16.mxu0 0
    %438 = vmatpush2.bf16.msra.mxu0 %v333
    %439 = vmatprep.subr.bf16.mxu0 0
    %440 = vmatpush2.bf16.msra.mxu0 %v332
    %441 = vmatprep.subr.bf16.mxu0 0
    %442 = vmatpush2.bf16.msra.mxu0 %v331
    %443 = vmatprep.mubr.bf16.mxu0 %v107
    %444 = vmatmul.mubr.bf16.gmra.mxu0 %v106
    %v445 = vpop.f32.mrf.mxu0
    %v446 = vadd.f32 %v406, %v445
    %v447 = vpop.f32.mrf.mxu0
    %v448 = vpop.f32.mrf.mxu0
    %v449 = vpop.f32.mrf.mxu0
    %450 = vdwg.mxu0
    %v451 = vmax.f32 %v446, 0.0
    %v452 = vpack.c.bf16 %v451, %v451
    %v453 = vld [vmem:[#allocation7] sm:$0xf]
    %v454 = vld [vmem:[#allocation7 + $0x4] sm:$0xf]
    %v455 = vld [vmem:[#allocation7 + $0x8] sm:$0xf]
    %v456 = vld [vmem:[#allocation7 + $0xc] sm:$0xf]
    %v457 = vld [vmem:[#allocation7 + $0x10] sm:$0xf]
    %v458 = vld [vmem:[#allocation7 + $0x14] sm:$0xf]
    %v459 = vld [vmem:[#allocation7 + $0x18] sm:$0xf]
    %v460 = vld [vmem:[#allocation7 + $0x1c] sm:$0xf]
    %v461 = vld [vmem:[#allocation7 + $0x20] sm:$0xf]
    %v462 = vld [vmem:[#allocation7 + $0x24] sm:$0xf]
    %v463 = vld [vmem:[#allocation7 + $0x28] sm:$0xf]
    %v464 = vld [vmem:[#allocation7 + $0x2c] sm:$0xf]
    %v465 = vld [vmem:[#allocation7 + $0x30] sm:$0xf]
    %v466 = vld [vmem:[#allocation7 + $0x34] sm:$0xf]
    %v467 = vld [vmem:[#allocation7 + $0x38] sm:$0xf]
    %v468 = vld [vmem:[#allocation7 + $0x3c] sm:$0xf]
    %v469 = vld [vmem:[%s4] sm:$0x1]
    %v471 = vlaneseq
    %v472 = vshrl.u32 %v471, 7
    %v473 = vsub.s32 0, %v472
    %v474 = vrot.slane %v469, %v473
    %v492 = vunpack.c.l.b16 %v453
    %v493 = vunpack.c.l.b16 %v454
    %v494 = vunpack.c.l.b16 %v455
    %v495 = vunpack.c.l.b16 %v456
    %v496 = vunpack.c.l.b16 %v457
    %v497 = vunpack.c.l.b16 %v458
    %v498 = vunpack.c.l.b16 %v459
    %v499 = vunpack.c.l.b16 %v460
    %v500 = vunpack.c.l.b16 %v461
    %v501 = vunpack.c.l.b16 %v462
    %v502 = vunpack.c.l.b16 %v463
    %v503 = vunpack.c.l.b16 %v464
    %v504 = vunpack.c.l.b16 %v465
    %v505 = vunpack.c.l.b16 %v466
    %v506 = vunpack.c.l.b16 %v467
    %v507 = vunpack.c.l.b16 %v468
    %v508 = vpack.c.b16 %v493, %v492
    %v509 = vpack.c.b16 %v495, %v494
    %v510 = vpack.c.b16 %v497, %v496
    %v511 = vpack.c.b16 %v499, %v498
    %v512 = vpack.c.b16 %v501, %v500
    %v513 = vpack.c.b16 %v503, %v502
    %v514 = vpack.c.b16 %v505, %v504
    %v515 = vpack.c.b16 %v507, %v506
    %524 = vmatprep.subr.bf16.mxu0 0
    %525 = vmatpush1.bf16.msra.mxu0 %v515
    %526 = vmatprep.subr.bf16.mxu0 0
    %527 = vmatpush1.bf16.msra.mxu0 %v514
    %528 = vmatprep.subr.bf16.mxu0 0
    %529 = vmatpush1.bf16.msra.mxu0 %v513
    %530 = vmatprep.subr.bf16.mxu0 0
    %531 = vmatpush1.bf16.msra.mxu0 %v512
    %532 = vmatprep.subr.bf16.mxu0 0
    %533 = vmatpush1.bf16.msra.mxu0 %v511
    %534 = vmatprep.subr.bf16.mxu0 0
    %535 = vmatpush1.bf16.msra.mxu0 %v510
    %536 = vmatprep.subr.bf16.mxu0 0
    %537 = vmatpush1.bf16.msra.mxu0 %v509
    %538 = vmatprep.subr.bf16.mxu0 0
    %539 = vmatpush1.bf16.msra.mxu0 %v508
    %540 = vmatprep.subr.bf16.mxu0 0
    %541 = vmatpush2.bf16.msra.mxu0 0
    %542 = vmatprep.subr.bf16.mxu0 0
    %543 = vmatpush2.bf16.msra.mxu0 0
    %544 = vmatprep.subr.bf16.mxu0 0
    %545 = vmatpush2.bf16.msra.mxu0 0
    %546 = vmatprep.subr.bf16.mxu0 0
    %547 = vmatpush2.bf16.msra.mxu0 0
    %548 = vmatprep.subr.bf16.mxu0 0
    %549 = vmatpush2.bf16.msra.mxu0 0
    %550 = vmatprep.subr.bf16.mxu0 0
    %551 = vmatpush2.bf16.msra.mxu0 0
    %552 = vmatprep.subr.bf16.mxu0 0
    %553 = vmatpush2.bf16.msra.mxu0 0
    %554 = vmatprep.subr.bf16.mxu0 0
    %555 = vmatpush2.bf16.msra.mxu0 0
    %556 = vmatprep.mubr.bf16.mxu0 0
    %557 = vmatmul.mubr.bf16.gmra.mxu0 %v452
    %v558 = vpop.f32.mrf.mxu0
    %v559 = vadd.f32 %v474, %v558
    %v560 = vpop.f32.mrf.mxu0
    %v561 = vpop.f32.mrf.mxu0
    %v562 = vpop.f32.mrf.mxu0
    %563 = vdwg.mxu0
    %v564 = vmax.f32 %v559, 0.0
    %v565 = vpack.c.bf16 %v564, %v564
    %v566 = vld [vmem:[#allocation8] sm:$0xf]
    %v567 = vld [vmem:[#allocation8 + $0x4] sm:$0xf]
    %v568 = vld [vmem:[#allocation8 + $0x8] sm:$0xf]
    %v569 = vld [vmem:[#allocation8 + $0xc] sm:$0xf]
    %v570 = vld [vmem:[#allocation8 + $0x10] sm:$0xf]
    %v571 = vld [vmem:[#allocation8 + $0x14] sm:$0xf]
    %v572 = vld [vmem:[#allocation8 + $0x18] sm:$0xf]
    %v573 = vld [vmem:[#allocation8 + $0x1c] sm:$0xf]
    %v574 = vld [vmem:[#allocation8 + $0x20] sm:$0xf]
    %v575 = vld [vmem:[#allocation8 + $0x24] sm:$0xf]
    %v576 = vld [vmem:[#allocation8 + $0x28] sm:$0xf]
    %v577 = vld [vmem:[#allocation8 + $0x2c] sm:$0xf]
    %v578 = vld [vmem:[#allocation8 + $0x30] sm:$0xf]
    %v579 = vld [vmem:[#allocation8 + $0x34] sm:$0xf]
    %v580 = vld [vmem:[#allocation8 + $0x38] sm:$0xf]
    %v581 = vld [vmem:[#allocation8 + $0x3c] sm:$0xf]
    %v582 = vld [vmem:[%s6] sm:$0x1]
    %v584 = vlaneseq
    %v585 = vshrl.u32 %v584, 7
    %v586 = vsub.s32 0, %v585
    %v587 = vrot.slane %v582, %v586
    %v605 = vunpack.c.l.b16 %v566
    %v606 = vunpack.c.l.b16 %v567
    %v607 = vunpack.c.l.b16 %v568
    %v608 = vunpack.c.l.b16 %v569
    %v609 = vunpack.c.l.b16 %v570
    %v610 = vunpack.c.l.b16 %v571
    %v611 = vunpack.c.l.b16 %v572
    %v612 = vunpack.c.l.b16 %v573
    %v613 = vunpack.c.l.b16 %v574
    %v614 = vunpack.c.l.b16 %v575
    %v615 = vunpack.c.l.b16 %v576
    %v616 = vunpack.c.l.b16 %v577
    %v617 = vunpack.c.l.b16 %v578
    %v618 = vunpack.c.l.b16 %v579
    %v619 = vunpack.c.l.b16 %v580
    %v620 = vunpack.c.l.b16 %v581
    %v621 = vpack.c.b16 %v606, %v605
    %v622 = vpack.c.b16 %v608, %v607
    %v623 = vpack.c.b16 %v610, %v609
    %v624 = vpack.c.b16 %v612, %v611
    %v625 = vpack.c.b16 %v614, %v613
    %v626 = vpack.c.b16 %v616, %v615
    %v627 = vpack.c.b16 %v618, %v617
    %v628 = vpack.c.b16 %v620, %v619
    %637 = vmatprep.subr.bf16.mxu0 0
    %638 = vmatpush1.bf16.msra.mxu0 %v628
    %639 = vmatprep.subr.bf16.mxu0 0
    %640 = vmatpush1.bf16.msra.mxu0 %v627
    %641 = vmatprep.subr.bf16.mxu0 0
    %642 = vmatpush1.bf16.msra.mxu0 %v626
    %643 = vmatprep.subr.bf16.mxu0 0
    %644 = vmatpush1.bf16.msra.mxu0 %v625
    %645 = vmatprep.subr.bf16.mxu0 0
    %646 = vmatpush1.bf16.msra.mxu0 %v624
    %647 = vmatprep.subr.bf16.mxu0 0
    %648 = vmatpush1.bf16.msra.mxu0 %v623
    %649 = vmatprep.subr.bf16.mxu0 0
    %650 = vmatpush1.bf16.msra.mxu0 %v622
    %651 = vmatprep.subr.bf16.mxu0 0
    %652 = vmatpush1.bf16.msra.mxu0 %v621
    %653 = vmatprep.subr.bf16.mxu0 0
    %654 = vmatpush2.bf16.msra.mxu0 0
    %655 = vmatprep.subr.bf16.mxu0 0
    %656 = vmatpush2.bf16.msra.mxu0 0
    %657 = vmatprep.subr.bf16.mxu0 0
    %658 = vmatpush2.bf16.msra.mxu0 0
    %659 = vmatprep.subr.bf16.mxu0 0
    %660 = vmatpush2.bf16.msra.mxu0 0
    %661 = vmatprep.subr.bf16.mxu0 0
    %662 = vmatpush2.bf16.msra.mxu0 0
    %663 = vmatprep.subr.bf16.mxu0 0
    %664 = vmatpush2.bf16.msra.mxu0 0
    %665 = vmatprep.subr.bf16.mxu0 0
    %666 = vmatpush2.bf16.msra.mxu0 0
    %667 = vmatprep.subr.bf16.mxu0 0
    %668 = vmatpush2.bf16.msra.mxu0 0
    %669 = vmatprep.mubr.bf16.mxu0 0
    %670 = vmatmul.mubr.bf16.gmra.mxu0 %v565
    %v671 = vpop.f32.mrf.mxu0
    %v672 = vadd.f32 %v587, %v671
    %v673 = vpop.f32.mrf.mxu0
    %v674 = vpop.f32.mrf.mxu0
    %v675 = vpop.f32.mrf.mxu0
    %676 = vdwg.mxu0
    %v677 = vpack.c.bf16 %v672, %v672
    %678 = vst [vmem:[#allocation10] sm:$0x1] %v677
    // Predicated region
    $region46: #{tpu_custom_call.1} parent=1 // pred_check
      _
    $region47: #{tpu_custom_call.1} parent=1 // pred_check_branch
      %680 = sbr.rel (0) target = $region49
    $region48: #{tpu_custom_call.1} parent=1 // pred_region
      %s682 = ssub.s32 16, 16
      %683 = vsyncadd [#allocation4], %s682
      %s685 = sshll.u32 [#allocation10], 4
      %s686 = int_to_ptr.vmem [resolvable:$true] %s685
      %688 = dma.vmem_to_hbm [thread:$0]  %s686, 16, %s7, [#allocation4]
    $region49: #{tpu_custom_call.1} parent=1 // pred_fallthru
      _
    // Predicated region
    $region50: #{tpu_custom_call.1} parent=1 // pred_check
      _
    $region51: #{tpu_custom_call.1} parent=1 // pred_check_branch
      %690 = sbr.rel (0) target = $region53
    $region52: #{tpu_custom_call.1} parent=1 // pred_region
      %691 = dma.done [#allocation4], 16
    $region53: #{tpu_custom_call.1} parent=1 // pred_fallthru
      _
    %692 = vsyncpa [#allocation3], 1
    %693 = vsyncpa [#allocation6], 1
    %694 = vsyncpa [#allocation9], 1
    %695 = vsyncpa [#allocation4], 1

// kernel: tpu_custom_call.1
$region0: #{tpu_custom_call.1}
  #allocation0 [shape = 'u32[]', space=smem, size = 0x4, offset = 0x4, fixed_abs, tag = 'smem constant byte address 0x4 - core index']
  #allocation1 [shape = 'u32[144,128]{1,0:T(1,128)}', space=vmem, size = 0x12000, scoped, tag = 'internal scratch']
  %s0 = inlined_call_operand.hbm [shape: f32[2,512], index: 0, kind: input, shape index: {}]
  %s1 = inlined_call_operand.hbm [shape: bf16[512,128], index: 1, kind: input, shape index: {}]
  %s2 = inlined_call_operand.vmem [shape: f32[1,128], index: 2, kind: input, shape index: {}]
  %s3 = inlined_call_operand.hbm [shape: bf16[128,128], index: 3, kind: input, shape index: {}]
  %s4 = inlined_call_operand.vmem [shape: f32[1,128], index: 4, kind: input, shape index: {}]
  %s5 = inlined_call_operand.hbm [shape: bf16[128,128], index: 5, kind: input, shape index: {}]
  %s6 = inlined_call_operand.vmem [shape: f32[1,128], index: 6, kind: input, shape index: {}]
  %s7 = inlined_call_operand.hbm [shape: bf16[2,128], index: 7, kind: output, shape index: {}]
  %s8 = sld [smem:[#allocation0]]
  $region54: #{tpu_custom_call.1} parent=0
    _
  %s10 = ssub.s32 1, %s8
  %s11 = scalar_select 0, %s10, %s8
  $region1: #{tpu_custom_call.1} parent=0
    #allocation2 [shape = 'u8[4096]{0}', space=vmem, size = 0x1000, scoped, tag = 'input window, operand 0, single buffered']
    #allocation3 [shape = 's32[1]{0}', space=sflag, size = 0x4, scoped, tag = 'scoped memory for tpu_custom_call.1']
    #allocation4 [shape = 's32[1]{0}', space=sflag, size = 0x4, scoped, tag = 'scoped memory for tpu_custom_call.1']
    #allocation5 [shape = 'u8[131072]{0}', space=vmem, size = 0x20000, scoped, tag = 'input window, operand 1, single buffered']
    #allocation6 [shape = 's32[1]{0}', space=sflag, size = 0x4, scoped, tag = 'scoped memory for tpu_custom_call.1']
    #allocation7 [shape = 'u8[32768]{0}', space=vmem, size = 0x8000, scoped, tag = 'input window, operand 3, single buffered']
    #allocation8 [shape = 'u8[32768]{0}', space=vmem, size = 0x8000, scoped, tag = 'input window, operand 5, single buffered']
    #allocation9 [shape = 's32[1]{0}', space=sflag, size = 0x4, scoped, tag = 'scoped memory for tpu_custom_call.1']
    #allocation10 [shape = 'u8[512]{0}', space=vmem, size = 0x400, scoped, tag = 'output window, operand 0, single buffered']
    %12 = vsyncpa [#allocation3], 0
    %13 = vsyncpa [#allocation6], 0
    %14 = vsyncpa [#allocation9], 0
    %15 = vsyncpa [#allocation4], 0
    // Predicated region
    $region2: #{tpu_custom_call.1} parent=1 // pred_check
      _
    $region3: #{tpu_custom_call.1} parent=1 // pred_check_branch
      %17 = sbr.rel (0) target = $region5
    $region4: #{tpu_custom_call.1} parent=1 // pred_region
      %s19 = ssub.s32 128, 128
      %20 = vsyncadd [#allocation3], %s19
      %s22 = sshll.u32 [#allocation2], 4
      %s23 = int_to_ptr.vmem [resolvable:$true] %s22
      %25 = dma.hbm_to_vmem [thread:$0]  %s0, 128, %s23, [#allocation3]
    $region5: #{tpu_custom_call.1} parent=1 // pred_fallthru
      _
    // Predicated region
    $region6: #{tpu_custom_call.1} parent=1 // pred_check
      _
    $region7: #{tpu_custom_call.1} parent=1 // pred_check_branch
      %27 = sbr.rel (0) target = $region9
    $region8: #{tpu_custom_call.1} parent=1 // pred_region
      %s29 = ssub.s32 4096, 4096
      %30 = vsyncadd [#allocation6], %s29
      %s31 = sshll.u32 [#allocation5], 4
      %s32 = int_to_ptr.vmem [resolvable:$true] %s31
      %37 = dma.hbm_to_vmem [thread:$0]  %s1, 4096, %s32, [#allocation6], 64, 64, 4
    $region9: #{tpu_custom_call.1} parent=1 // pred_fallthru
      _
    // Predicated region
    $region10: #{tpu_custom_call.1} parent=1 // pred_check
      _
    $region11: #{tpu_custom_call.1} parent=1 // pred_check_branch
      %39 = sbr.rel (0) target = $region13
    $region12: #{tpu_custom_call.1} parent=1 // pred_region
      _
    $region13: #{tpu_custom_call.1} parent=1 // pred_fallthru
      _
    // Predicated region
    $region14: #{tpu_custom_call.1} parent=1 // pred_check
      _
    $region15: #{tpu_custom_call.1} parent=1 // pred_check_branch
      %41 = sbr.rel (0) target = $region17
    $region16: #{tpu_custom_call.1} parent=1 // pred_region
      %s43 = ssub.s32 1024, 1024
      %44 = vsyncadd [#allocation6], %s43
      %s45 = sshll.u32 [#allocation7], 4
      %s46 = int_to_ptr.vmem [resolvable:$true] %s45
      %51 = dma.hbm_to_vmem [thread:$0]  %s3, 1024, %s46, [#allocation6], 64, 64, 4
    $region17: #{tpu_custom_call.1} parent=1 // pred_fallthru
      _
    // Predicated region
    $region18: #{tpu_custom_call.1} parent=1 // pred_check
      _
    $region19: #{tpu_custom_call.1} parent=1 // pred_check_branch
      %53 = sbr.rel (0) target = $region21
    $region20: #{tpu_custom_call.1} parent=1 // pred_region
      _
    $region21: #{tpu_custom_call.1} parent=1 // pred_fallthru
      _
    // Predicated region
    $region22: #{tpu_custom_call.1} parent=1 // pred_check
      _
    $region23: #{tpu_custom_call.1} parent=1 // pred_check_branch
      %55 = sbr.rel (0) target = $region25
    $region24: #{tpu_custom_call.1} parent=1 // pred_region
      %s57 = ssub.s32 1024, 1024
      %58 = vsyncadd [#allocation9], %s57
      %s59 = sshll.u32 [#allocation8], 4
      %s60 = int_to_ptr.vmem [resolvable:$true] %s59
      %65 = dma.hbm_to_vmem [thread:$0]  %s5, 1024, %s60, [#allocation9], 64, 64, 4
    $region25: #{tpu_custom_call.1} parent=1 // pred_fallthru
      _
    // Predicated region
    $region26: #{tpu_custom_call.1} parent=1 // pred_check
      _
    $region27: #{tpu_custom_call.1} parent=1 // pred_check_branch
      %67 = sbr.rel (0) target = $region29
    $region28: #{tpu_custom_call.1} parent=1 // pred_region
      _
    $region29: #{tpu_custom_call.1} parent=1 // pred_fallthru
      _
    // Predicated region
    $region30: #{tpu_custom_call.1} parent=1 // pred_check
      _
    $region31: #{tpu_custom_call.1} parent=1 // pred_check_branch
      %69 = sbr.rel (0) target = $region33
    $region32: #{tpu_custom_call.1} parent=1 // pred_region
      %70 = dma.done [#allocation3], 128
    $region33: #{tpu_custom_call.1} parent=1 // pred_fallthru
      _
    // Predicated region
    $region34: #{tpu_custom_call.1} parent=1 // pred_check
      _
    $region35: #{tpu_custom_call.1} parent=1 // pred_check_branch
      %72 = sbr.rel (0) target = $region37
    $region36: #{tpu_custom_call.1} parent=1 // pred_region
      %73 = dma.done [#allocation6], 4096
    $region37: #{tpu_custom_call.1} parent=1 // pred_fallthru
      _
    // Predicated region
    $region38: #{tpu_custom_call.1} parent=1 // pred_check
      _
    $region39: #{tpu_custom_call.1} parent=1 // pred_check_branch
      %75 = sbr.rel (0) target = $region41
    $region40: #{tpu_custom_call.1} parent=1 // pred_region
      %76 = dma.done [#allocation6], 1024
    $region41: #{tpu_custom_call.1} parent=1 // pred_fallthru
      _
    // Predicated region
    $region42: #{tpu_custom_call.1} parent=1 // pred_check
      _
    $region43: #{tpu_custom_call.1} parent=1 // pred_check_branch
      %78 = sbr.rel (0) target = $region45
    $region44: #{tpu_custom_call.1} parent=1 // pred_region
      %79 = dma.done [#allocation9], 1024
    $region45: #{tpu_custom_call.1} parent=1 // pred_fallthru
      _
    %v81 = vld [vmem:[#allocation2] sm:$0xff]
    %v83 = vcombine.high %v81, %v81
    %v85 = vunpack.c.l.s4 1983009808
    %v86 = vunpack.c.0.s8 %v85
    %v87 = vlaneseq
    %v88 = vshrl.u32 %v87, 7
    %v89 = vsub.s32 %v86, %v88
    %v90 = vrot.slane %v81, %v89
    %v92 = vunpack.c.l.s4 1983009808
    %v93 = vunpack.c.0.s8 %v92
    %v94 = vlaneseq
    %v95 = vshrl.u32 %v94, 7
    %v96 = vsub.s32 %v93, %v95
    %v97 = vrot.slane %v83, %v96
    %v98 = vcombine.high %v90, %v90
    %v99 = vcombine.high %v97, %v97
    %v104 = vpack.c.bf16 %v90, %v90
    %v105 = vpack.c.bf16 %v98, %v98
    %v106 = vpack.c.bf16 %v97, %v97
    %v107 = vpack.c.bf16 %v99, %v99
    %v108 = vld [vmem:[#allocation5] sm:$0xf]
    %v109 = vld [vmem:[#allocation5 + $0x4] sm:$0xf]
    %v110 = vld [vmem:[#allocation5 + $0x8] sm:$0xf]
    %v111 = vld [vmem:[#allocation5 + $0xc] sm:$0xf]
    %v112 = vld [vmem:[#allocation5 + $0x10] sm:$0xf]
    %v113 = vld [vmem:[#allocation5 + $0x14] sm:$0xf]
    %v114 = vld [vmem:[#allocation5 + $0x18] sm:$0xf]
    %v115 = vld [vmem:[#allocation5 + $0x1c] sm:$0xf]
    %v116 = vld [vmem:[#allocation5 + $0x20] sm:$0xf]
    %v117 = vld [vmem:[#allocation5 + $0x24] sm:$0xf]
    %v118 = vld [vmem:[#allocation5 + $0x28] sm:$0xf]
    %v119 = vld [vmem:[#allocation5 + $0x2c] sm:$0xf]
    %v120 = vld [vmem:[#allocation5 + $0x30] sm:$0xf]
    %v121 = vld [vmem:[#allocation5 + $0x34] sm:$0xf]
    %v122 = vld [vmem:[#allocation5 + $0x38] sm:$0xf]
    %v123 = vld [vmem:[#allocation5 + $0x3c] sm:$0xf]
    %v124 = vld [vmem:[#allocation5 + $0x40] sm:$0xf]
    %v125 = vld [vmem:[#allocation5 + $0x44] sm:$0xf]
    %v126 = vld [vmem:[#allocation5 + $0x48] sm:$0xf]
    %v127 = vld [vmem:[#allocation5 + $0x4c] sm:$0xf]
    %v128 = vld [vmem:[#allocation5 + $0x50] sm:$0xf]
    %v129 = vld [vmem:[#allocation5 + $0x54] sm:$0xf]
    %v130 = vld [vmem:[#allocation5 + $0x58] sm:$0xf]
    %v131 = vld [vmem:[#allocation5 + $0x5c] sm:$0xf]
    %v132 = vld [vmem:[#allocation5 + $0x60] sm:$0xf]
    %v133 = vld [vmem:[#allocation5 + $0x64] sm:$0xf]
    %v134 = vld [vmem:[#allocation5 + $0x68] sm:$0xf]
    %v135 = vld [vmem:[#allocation5 + $0x6c] sm:$0xf]
    %v136 = vld [vmem:[#allocation5 + $0x70] sm:$0xf]
    %v137 = vld [vmem:[#allocation5 + $0x74] sm:$0xf]
    %v138 = vld [vmem:[#allocation5 + $0x78] sm:$0xf]
    %v139 = vld [vmem:[#allocation5 + $0x7c] sm:$0xf]
    %v140 = vld [vmem:[#allocation5 + $0x80] sm:$0xf]
    %v141 = vld [vmem:[#allocation5 + $0x84] sm:$0xf]
    %v142 = vld [vmem:[#allocation5 + $0x88] sm:$0xf]
    %v143 = vld [vmem:[#allocation5 + $0x8c] sm:$0xf]
    %v144 = vld [vmem:[#allocation5 + $0x90] sm:$0xf]
    %v145 = vld [vmem:[#allocation5 + $0x94] sm:$0xf]
    %v146 = vld [vmem:[#allocation5 + $0x98] sm:$0xf]
    %v147 = vld [vmem:[#allocation5 + $0x9c] sm:$0xf]
    %v148 = vld [vmem:[#allocation5 + $0xa0] sm:$0xf]
    %v149 = vld [vmem:[#allocation5 + $0xa4] sm:$0xf]
    %v150 = vld [vmem:[#allocation5 + $0xa8] sm:$0xf]
    %v151 = vld [vmem:[#allocation5 + $0xac] sm:$0xf]
    %v152 = vld [vmem:[#allocation5 + $0xb0] sm:$0xf]
    %v153 = vld [vmem:[#allocation5 + $0xb4] sm:$0xf]
    %v154 = vld [vmem:[#allocation5 + $0xb8] sm:$0xf]
    %v155 = vld [vmem:[#allocation5 + $0xbc] sm:$0xf]
    %v156 = vld [vmem:[#allocation5 + $0xc0] sm:$0xf]
    %v157 = vld [vmem:[#allocation5 + $0xc4] sm:$0xf]
    %v158 = vld [vmem:[#allocation5 + $0xc8] sm:$0xf]
    %v159 = vld [vmem:[#allocation5 + $0xcc] sm:$0xf]
    %v160 = vld [vmem:[#allocation5 + $0xd0] sm:$0xf]
    %v161 = vld [vmem:[#allocation5 + $0xd4] sm:$0xf]
    %v162 = vld [vmem:[#allocation5 + $0xd8] sm:$0xf]
    %v163 = vld [vmem:[#allocation5 + $0xdc] sm:$0xf]
    %v164 = vld [vmem:[#allocation5 + $0xe0] sm:$0xf]
    %v165 = vld [vmem:[#allocation5 + $0xe4] sm:$0xf]
    %v166 = vld [vmem:[#allocation5 + $0xe8] sm:$0xf]
    %v167 = vld [vmem:[#allocation5 + $0xec] sm:$0xf]
    %v168 = vld [vmem:[#allocation5 + $0xf0] sm:$0xf]
    %v169 = vld [vmem:[#allocation5 + $0xf4] sm:$0xf]
    %v170 = vld [vmem:[#allocation5 + $0xf8] sm:$0xf]
    %v171 = vld [vmem:[#allocation5 + $0xfc] sm:$0xf]
    %v172 = vld [vmem:[%s2] sm:$0x1]
    %v174 = vlaneseq
    %v175 = vshrl.u32 %v174, 7
    %v176 = vsub.s32 0, %v175
    %v177 = vrot.slane %v172, %v176
    %v243 = vunpack.c.l.b16 %v108
    %v244 = vunpack.c.l.b16 %v109
    %v245 = vunpack.c.l.b16 %v110
    %v246 = vunpack.c.l.b16 %v111
    %v247 = vunpack.c.l.b16 %v112
    %v248 = vunpack.c.l.b16 %v113
    %v249 = vunpack.c.l.b16 %v114
    %v250 = vunpack.c.l.b16 %v115
    %v251 = vunpack.c.l.b16 %v116
    %v252 = vunpack.c.l.b16 %v117
    %v253 = vunpack.c.l.b16 %v118
    %v254 = vunpack.c.l.b16 %v119
    %v255 = vunpack.c.l.b16 %v120
    %v256 = vunpack.c.l.b16 %v121
    %v257 = vunpack.c.l.b16 %v122
    %v258 = vunpack.c.l.b16 %v123
    %v259 = vunpack.c.l.b16 %v124
    %v260 = vunpack.c.l.b16 %v125
    %v261 = vunpack.c.l.b16 %v126
    %v262 = vunpack.c.l.b16 %v127
    %v263 = vunpack.c.l.b16 %v128
    %v264 = vunpack.c.l.b16 %v129
    %v265 = vunpack.c.l.b16 %v130
    %v266 = vunpack.c.l.b16 %v131
    %v267 = vunpack.c.l.b16 %v132
    %v268 = vunpack.c.l.b16 %v133
    %v269 = vunpack.c.l.b16 %v134
    %v270 = vunpack.c.l.b16 %v135
    %v271 = vunpack.c.l.b16 %v136
    %v272 = vunpack.c.l.b16 %v137
    %v273 = vunpack.c.l.b16 %v138
    %v274 = vunpack.c.l.b16 %v139
    %v275 = vunpack.c.l.b16 %v140
    %v276 = vunpack.c.l.b16 %v141
    %v277 = vunpack.c.l.b16 %v142
    %v278 = vunpack.c.l.b16 %v143
    %v279 = vunpack.c.l.b16 %v144
    %v280 = vunpack.c.l.b16 %v145
    %v281 = vunpack.c.l.b16 %v146
    %v282 = vunpack.c.l.b16 %v147
    %v283 = vunpack.c.l.b16 %v148
    %v284 = vunpack.c.l.b16 %v149
    %v285 = vunpack.c.l.b16 %v150
    %v286 = vunpack.c.l.b16 %v151
    %v287 = vunpack.c.l.b16 %v152
    %v288 = vunpack.c.l.b16 %v153
    %v289 = vunpack.c.l.b16 %v154
    %v290 = vunpack.c.l.b16 %v155
    %v291 = vunpack.c.l.b16 %v156
    %v292 = vunpack.c.l.b16 %v157
    %v293 = vunpack.c.l.b16 %v158
    %v294 = vunpack.c.l.b16 %v159
    %v295 = vunpack.c.l.b16 %v160
    %v296 = vunpack.c.l.b16 %v161
    %v297 = vunpack.c.l.b16 %v162
    %v298 = vunpack.c.l.b16 %v163
    %v299 = vunpack.c.l.b16 %v164
    %v300 = vunpack.c.l.b16 %v165
    %v301 = vunpack.c.l.b16 %v166
    %v302 = vunpack.c.l.b16 %v167
    %v303 = vunpack.c.l.b16 %v168
    %v304 = vunpack.c.l.b16 %v169
    %v305 = vunpack.c.l.b16 %v170
    %v306 = vunpack.c.l.b16 %v171
    %v307 = vpack.c.b16 %v244, %v243
    %v308 = vpack.c.b16 %v246, %v245
    %v309 = vpack.c.b16 %v248, %v247
    %v310 = vpack.c.b16 %v250, %v249
    %v311 = vpack.c.b16 %v252, %v251
    %v312 = vpack.c.b16 %v254, %v253
    %v313 = vpack.c.b16 %v256, %v255
    %v314 = vpack.c.b16 %v258, %v257
    %v315 = vpack.c.b16 %v260, %v259
    %v316 = vpack.c.b16 %v262, %v261
    %v317 = vpack.c.b16 %v264, %v263
    %v318 = vpack.c.b16 %v266, %v265
    %v319 = vpack.c.b16 %v268, %v267
    %v320 = vpack.c.b16 %v270, %v269
    %v321 = vpack.c.b16 %v272, %v271
    %v322 = vpack.c.b16 %v274, %v273
    %v323 = vpack.c.b16 %v276, %v275
    %v324 = vpack.c.b16 %v278, %v277
    %v325 = vpack.c.b16 %v280, %v279
    %v326 = vpack.c.b16 %v282, %v281
    %v327 = vpack.c.b16 %v284, %v283
    %v328 = vpack.c.b16 %v286, %v285
    %v329 = vpack.c.b16 %v288, %v287
    %v330 = vpack.c.b16 %v290, %v289
    %v331 = vpack.c.b16 %v292, %v291
    %v332 = vpack.c.b16 %v294, %v293
    %v333 = vpack.c.b16 %v296, %v295
    %v334 = vpack.c.b16 %v298, %v297
    %v335 = vpack.c.b16 %v300, %v299
    %v336 = vpack.c.b16 %v302, %v301
    %v337 = vpack.c.b16 %v304, %v303
    %v338 = vpack.c.b16 %v306, %v305
    %371 = vmatprep.subr.bf16.mxu0 0
    %372 = vmatpush1.bf16.msra.mxu0 %v314
    %373 = vmatprep.subr.bf16.mxu0 0
    %374 = vmatpush1.bf16.msra.mxu0 %v313
    %375 = vmatprep.subr.bf16.mxu0 0
    %376 = vmatpush1.bf16.msra.mxu0 %v312
    %377 = vmatprep.subr.bf16.mxu0 0
    %378 = vmatpush1.bf16.msra.mxu0 %v311
    %379 = vmatprep.subr.bf16.mxu0 0
    %380 = vmatpush1.bf16.msra.mxu0 %v310
    %381 = vmatprep.subr.bf16.mxu0 0
    %382 = vmatpush1.bf16.msra.mxu0 %v309
    %383 = vmatprep.subr.bf16.mxu0 0
    %384 = vmatpush1.bf16.msra.mxu0 %v308
    %385 = vmatprep.subr.bf16.mxu0 0
    %386 = vmatpush1.bf16.msra.mxu0 %v307
    %387 = vmatprep.subr.bf16.mxu0 0
    %388 = vmatpush2.bf16.msra.mxu0 %v322
    %389 = vmatprep.subr.bf16.mxu0 0
    %390 = vmatpush2.bf16.msra.mxu0 %v321
    %391 = vmatprep.subr.bf16.mxu0 0
    %392 = vmatpush2.bf16.msra.mxu0 %v320
    %393 = vmatprep.subr.bf16.mxu0 0
    %394 = vmatpush2.bf16.msra.mxu0 %v319
    %395 = vmatprep.subr.bf16.mxu0 0
    %396 = vmatpush2.bf16.msra.mxu0 %v318
    %397 = vmatprep.subr.bf16.mxu0 0
    %398 = vmatpush2.bf16.msra.mxu0 %v317
    %399 = vmatprep.subr.bf16.mxu0 0
    %400 = vmatpush2.bf16.msra.mxu0 %v316
    %401 = vmatprep.subr.bf16.mxu0 0
    %402 = vmatpush2.bf16.msra.mxu0 %v315
    %403 = vmatprep.mubr.bf16.mxu0 %v105
    %404 = vmatmul.mubr.bf16.gmra.mxu0 %v104
    %v405 = vpop.f32.mrf.mxu0
    %v406 = vadd.f32 %v177, %v405
    %v407 = vpop.f32.mrf.mxu0
    %v408 = vpop.f32.mrf.mxu0
    %v409 = vpop.f32.mrf.mxu0
    %410 = vdwg.mxu0
    %411 = vmatprep.subr.bf16.mxu0 0
    %412 = vmatpush1.bf16.msra.mxu0 %v330
    %413 = vmatprep.subr.bf16.mxu0 0
    %414 = vmatpush1.bf16.msra.mxu0 %v329
    %415 = vmatprep.subr.bf16.mxu0 0
    %416 = vmatpush1.bf16.msra.mxu0 %v328
    %417 = vmatprep.subr.bf16.mxu0 0
    %418 = vmatpush1.bf16.msra.mxu0 %v327
    %419 = vmatprep.subr.bf16.mxu0 0
    %420 = vmatpush1.bf16.msra.mxu0 %v326
    %421 = vmatprep.subr.bf16.mxu0 0
    %422 = vmatpush1.bf16.msra.mxu0 %v325
    %423 = vmatprep.subr.bf16.mxu0 0
    %424 = vmatpush1.bf16.msra.mxu0 %v324
    %425 = vmatprep.subr.bf16.mxu0 0
    %426 = vmatpush1.bf16.msra.mxu0 %v323
    %427 = vmatprep.subr.bf16.mxu0 0
    %428 = vmatpush2.bf16.msra.mxu0 %v338
    %429 = vmatprep.subr.bf16.mxu0 0
    %430 = vmatpush2.bf16.msra.mxu0 %v337
    %431 = vmatprep.subr.bf16.mxu0 0
    %432 = vmatpush2.bf16.msra.mxu0 %v336
    %433 = vmatprep.subr.bf16.mxu0 0
    %434 = vmatpush2.bf16.msra.mxu0 %v335
    %435 = vmatprep.subr.bf16.mxu0 0
    %436 = vmatpush2.bf16.msra.mxu0 %v334
    %437 = vmatprep.subr.bf16.mxu0 0
    %438 = vmatpush2.bf16.msra.mxu0 %v333
    %439 = vmatprep.subr.bf16.mxu0 0
    %440 = vmatpush2.bf16.msra.mxu0 %v332
    %441 = vmatprep.subr.bf16.mxu0 0
    %442 = vmatpush2.bf16.msra.mxu0 %v331
    %443 = vmatprep.mubr.bf16.mxu0 %v107
    %444 = vmatmul.mubr.bf16.gmra.mxu0 %v106
    %v445 = vpop.f32.mrf.mxu0
    %v446 = vadd.f32 %v406, %v445
    %v447 = vpop.f32.mrf.mxu0
    %v448 = vpop.f32.mrf.mxu0
    %v449 = vpop.f32.mrf.mxu0
    %450 = vdwg.mxu0
    %v451 = vmax.f32 %v446, 0.0
    %v452 = vpack.c.bf16 %v451, %v451
    %v453 = vld [vmem:[#allocation7] sm:$0xf]
    %v454 = vld [vmem:[#allocation7 + $0x4] sm:$0xf]
    %v455 = vld [vmem:[#allocation7 + $0x8] sm:$0xf]
    %v456 = vld [vmem:[#allocation7 + $0xc] sm:$0xf]
    %v457 = vld [vmem:[#allocation7 + $0x10] sm:$0xf]
    %v458 = vld [vmem:[#allocation7 + $0x14] sm:$0xf]
    %v459 = vld [vmem:[#allocation7 + $0x18] sm:$0xf]
    %v460 = vld [vmem:[#allocation7 + $0x1c] sm:$0xf]
    %v461 = vld [vmem:[#allocation7 + $0x20] sm:$0xf]
    %v462 = vld [vmem:[#allocation7 + $0x24] sm:$0xf]
    %v463 = vld [vmem:[#allocation7 + $0x28] sm:$0xf]
    %v464 = vld [vmem:[#allocation7 + $0x2c] sm:$0xf]
    %v465 = vld [vmem:[#allocation7 + $0x30] sm:$0xf]
    %v466 = vld [vmem:[#allocation7 + $0x34] sm:$0xf]
    %v467 = vld [vmem:[#allocation7 + $0x38] sm:$0xf]
    %v468 = vld [vmem:[#allocation7 + $0x3c] sm:$0xf]
    %v469 = vld [vmem:[%s4] sm:$0x1]
    %v471 = vlaneseq
    %v472 = vshrl.u32 %v471, 7
    %v473 = vsub.s32 0, %v472
    %v474 = vrot.slane %v469, %v473
    %v492 = vunpack.c.l.b16 %v453
    %v493 = vunpack.c.l.b16 %v454
    %v494 = vunpack.c.l.b16 %v455
    %v495 = vunpack.c.l.b16 %v456
    %v496 = vunpack.c.l.b16 %v457
    %v497 = vunpack.c.l.b16 %v458
    %v498 = vunpack.c.l.b16 %v459
    %v499 = vunpack.c.l.b16 %v460
    %v500 = vunpack.c.l.b16 %v461
    %v501 = vunpack.c.l.b16 %v462
    %v502 = vunpack.c.l.b16 %v463
    %v503 = vunpack.c.l.b16 %v464
    %v504 = vunpack.c.l.b16 %v465
    %v505 = vunpack.c.l.b16 %v466
    %v506 = vunpack.c.l.b16 %v467
    %v507 = vunpack.c.l.b16 %v468
    %v508 = vpack.c.b16 %v493, %v492
    %v509 = vpack.c.b16 %v495, %v494
    %v510 = vpack.c.b16 %v497, %v496
    %v511 = vpack.c.b16 %v499, %v498
    %v512 = vpack.c.b16 %v501, %v500
    %v513 = vpack.c.b16 %v503, %v502
    %v514 = vpack.c.b16 %v505, %v504
    %v515 = vpack.c.b16 %v507, %v506
    %524 = vmatprep.subr.bf16.mxu0 0
    %525 = vmatpush1.bf16.msra.mxu0 %v515
    %526 = vmatprep.subr.bf16.mxu0 0
    %527 = vmatpush1.bf16.msra.mxu0 %v514
    %528 = vmatprep.subr.bf16.mxu0 0
    %529 = vmatpush1.bf16.msra.mxu0 %v513
    %530 = vmatprep.subr.bf16.mxu0 0
    %531 = vmatpush1.bf16.msra.mxu0 %v512
    %532 = vmatprep.subr.bf16.mxu0 0
    %533 = vmatpush1.bf16.msra.mxu0 %v511
    %534 = vmatprep.subr.bf16.mxu0 0
    %535 = vmatpush1.bf16.msra.mxu0 %v510
    %536 = vmatprep.subr.bf16.mxu0 0
    %537 = vmatpush1.bf16.msra.mxu0 %v509
    %538 = vmatprep.subr.bf16.mxu0 0
    %539 = vmatpush1.bf16.msra.mxu0 %v508
    %540 = vmatprep.subr.bf16.mxu0 0
    %541 = vmatpush2.bf16.msra.mxu0 0
    %542 = vmatprep.subr.bf16.mxu0 0
    %543 = vmatpush2.bf16.msra.mxu0 0
    %544 = vmatprep.subr.bf16.mxu0 0
    %545 = vmatpush2.bf16.msra.mxu0 0
    %546 = vmatprep.subr.bf16.mxu0 0
    %547 = vmatpush2.bf16.msra.mxu0 0
    %548 = vmatprep.subr.bf16.mxu0 0
    %549 = vmatpush2.bf16.msra.mxu0 0
    %550 = vmatprep.subr.bf16.mxu0 0
    %551 = vmatpush2.bf16.msra.mxu0 0
    %552 = vmatprep.subr.bf16.mxu0 0
    %553 = vmatpush2.bf16.msra.mxu0 0
    %554 = vmatprep.subr.bf16.mxu0 0
    %555 = vmatpush2.bf16.msra.mxu0 0
    %556 = vmatprep.mubr.bf16.mxu0 0
    %557 = vmatmul.mubr.bf16.gmra.mxu0 %v452
    %v558 = vpop.f32.mrf.mxu0
    %v559 = vadd.f32 %v474, %v558
    %v560 = vpop.f32.mrf.mxu0
    %v561 = vpop.f32.mrf.mxu0
    %v562 = vpop.f32.mrf.mxu0
    %563 = vdwg.mxu0
    %v564 = vmax.f32 %v559, 0.0
    %v565 = vpack.c.bf16 %v564, %v564
    %v566 = vld [vmem:[#allocation8] sm:$0xf]
    %v567 = vld [vmem:[#allocation8 + $0x4] sm:$0xf]
    %v568 = vld [vmem:[#allocation8 + $0x8] sm:$0xf]
    %v569 = vld [vmem:[#allocation8 + $0xc] sm:$0xf]
    %v570 = vld [vmem:[#allocation8 + $0x10] sm:$0xf]
    %v571 = vld [vmem:[#allocation8 + $0x14] sm:$0xf]
    %v572 = vld [vmem:[#allocation8 + $0x18] sm:$0xf]
    %v573 = vld [vmem:[#allocation8 + $0x1c] sm:$0xf]
    %v574 = vld [vmem:[#allocation8 + $0x20] sm:$0xf]
    %v575 = vld [vmem:[#allocation8 + $0x24] sm:$0xf]
    %v576 = vld [vmem:[#allocation8 + $0x28] sm:$0xf]
    %v577 = vld [vmem:[#allocation8 + $0x2c] sm:$0xf]
    %v578 = vld [vmem:[#allocation8 + $0x30] sm:$0xf]
    %v579 = vld [vmem:[#allocation8 + $0x34] sm:$0xf]
    %v580 = vld [vmem:[#allocation8 + $0x38] sm:$0xf]
    %v581 = vld [vmem:[#allocation8 + $0x3c] sm:$0xf]
    %v582 = vld [vmem:[%s6] sm:$0x1]
    %v584 = vlaneseq
    %v585 = vshrl.u32 %v584, 7
    %v586 = vsub.s32 0, %v585
    %v587 = vrot.slane %v582, %v586
    %v605 = vunpack.c.l.b16 %v566
    %v606 = vunpack.c.l.b16 %v567
    %v607 = vunpack.c.l.b16 %v568
    %v608 = vunpack.c.l.b16 %v569
    %v609 = vunpack.c.l.b16 %v570
    %v610 = vunpack.c.l.b16 %v571
    %v611 = vunpack.c.l.b16 %v572
    %v612 = vunpack.c.l.b16 %v573
    %v613 = vunpack.c.l.b16 %v574
    %v614 = vunpack.c.l.b16 %v575
    %v615 = vunpack.c.l.b16 %v576
    %v616 = vunpack.c.l.b16 %v577
    %v617 = vunpack.c.l.b16 %v578
    %v618 = vunpack.c.l.b16 %v579
    %v619 = vunpack.c.l.b16 %v580
    %v620 = vunpack.c.l.b16 %v581
    %v621 = vpack.c.b16 %v606, %v605
    %v622 = vpack.c.b16 %v608, %v607
    %v623 = vpack.c.b16 %v610, %v609
    %v624 = vpack.c.b16 %v612, %v611
    %v625 = vpack.c.b16 %v614, %v613
    %v626 = vpack.c.b16 %v616, %v615
    %v627 = vpack.c.b16 %v618, %v617
    %v628 = vpack.c.b16 %v620, %v619
    %637 = vmatprep.subr.bf16.mxu0 0
    %638 = vmatpush1.bf16.msra.mxu0 %v628
    %639 = vmatprep.subr.bf16.mxu0 0
    %640 = vmatpush1.bf16.msra.mxu0 %v627
    %641 = vmatprep.subr.bf16.mxu0 0
    %642 = vmatpush1.bf16.msra.mxu0 %v626
    %643 = vmatprep.subr.bf16.mxu0 0
    %644 = vmatpush1.bf16.msra.mxu0 %v625
    %645 = vmatprep.subr.bf16.mxu0 0
    %646 = vmatpush1.bf16.msra.mxu0 %v624
    %647 = vmatprep.subr.bf16.mxu0 0
    %648 = vmatpush1.bf16.msra.mxu0 %v623
    %649 = vmatprep.subr.bf16.mxu0 0
    %650 = vmatpush1.bf16.msra.mxu0 %v622
    %651 = vmatprep.subr.bf16.mxu0 0
    %652 = vmatpush1.bf16.msra.mxu0 %v621
    %653 = vmatprep.subr.bf16.mxu0 0
    %654 = vmatpush2.bf16.msra.mxu0 0
    %655 = vmatprep.subr.bf16.mxu0 0
    %656 = vmatpush2.bf16.msra.mxu0 0
    %657 = vmatprep.subr.bf16.mxu0 0
    %658 = vmatpush2.bf16.msra.mxu0 0
    %659 = vmatprep.subr.bf16.mxu0 0
    %660 = vmatpush2.bf16.msra.mxu0 0
    %661 = vmatprep.subr.bf16.mxu0 0
    %662 = vmatpush2.bf16.msra.mxu0 0
    %663 = vmatprep.subr.bf16.mxu0 0
    %664 = vmatpush2.bf16.msra.mxu0 0
    %665 = vmatprep.subr.bf16.mxu0 0
    %666 = vmatpush2.bf16.msra.mxu0 0
    %667 = vmatprep.subr.bf16.mxu0 0
    %668 = vmatpush2.bf16.msra.mxu0 0
    %669 = vmatprep.mubr.bf16.mxu0 0
    %670 = vmatmul.mubr.bf16.gmra.mxu0 %v565
    %v671 = vpop.f32.mrf.mxu0
    %v672 = vadd.f32 %v587, %v671
    %v673 = vpop.f32.mrf.mxu0
    %v674 = vpop.f32.mrf.mxu0
    %v675 = vpop.f32.mrf.mxu0
    %676 = vdwg.mxu0
    %v677 = vpack.c.bf16 %v672, %v672
    %678 = vst [vmem:[#allocation10] sm:$0x1] %v677
    // Predicated region
    $region46: #{tpu_custom_call.1} parent=1 // pred_check
      _
    $region47: #{tpu_custom_call.1} parent=1 // pred_check_branch
      %680 = sbr.rel (0) target = $region49
    $region48: #{tpu_custom_call.1} parent=1 // pred_region
      %s682 = ssub.s32 16, 16
      %683 = vsyncadd [#allocation4], %s682
      %s685 = sshll.u32 [#allocation10], 4
      %s686 = int_to_ptr.vmem [resolvable:$true] %s685
      %688 = dma.vmem_to_hbm [thread:$0]  %s686, 16, %s7, [#allocation4]
    $region49: #{tpu_custom_call.1} parent=1 // pred_fallthru
      _
    // Predicated region
    $region50: #{tpu_custom_call.1} parent=1 // pred_check
      _
    $region51: #{tpu_custom_call.1} parent=1 // pred_check_branch
      %690 = sbr.rel (0) target = $region53
    $region52: #{tpu_custom_call.1} parent=1 // pred_region
      %691 = dma.done [#allocation4], 16
    $region53: #{tpu_custom_call.1} parent=1 // pred_fallthru
      _
    %692 = vsyncpa [#allocation3], 1
    %693 = vsyncpa [#allocation6], 1
    %694 = vsyncpa [#allocation9], 1
    %695 = vsyncpa [#allocation4], 1

</llo_original>
